<compile_context>
chip_gen: v6e
topology: v6e:2x2x1
jax: 0.10.0
libtpu: 0.0.40
codegen_flags: <defaults>
</compile_context>

<pallas_src>
import jax
import jax.numpy as jnp
from jax import lax
from jax.experimental import pallas as pl
from jax.experimental.pallas import tpu as pltpu


# -----------------------------------------------------------------------------
# Stage 1 kernel: 3x GCN layers + projection of concat([nodes, gcn(nodes)], -1).
# Runs once per forward (no grid); everything f32 and tiny.
# -----------------------------------------------------------------------------
def _label_graph_kernel(nodes_ref, adj_ref, wg_ref, bg_ref, wpa_ref, wpb_ref,
                        bp_ref, proj_ref):
    f32 = jnp.float32
    nodes = nodes_ref[...]                       # (L, F2p)  f32
    adj = adj_ref[...]                           # (L, L)    f32, normalized A + I

    gn = nodes
    for i in range(wg_ref.shape[0]):             # static unroll (propagation_layers)
        # (adj @ gn) @ W : same math as GCNConv (normalize then project), no casts.
        h = jnp.dot(jnp.dot(adj, gn, preferred_element_type=f32),
                    wg_ref[i], preferred_element_type=f32) + bg_ref[i]
        gn = jnp.where(h > 0, h, 0.01 * h)       # LeakyReLU(0.01); Dropout = identity (eval)

    # projection of concat([nodes, gn], -1) WITHOUT the concat: Wp split in halves.
    proj_ref[...] = (jnp.dot(nodes, wpa_ref[...], preferred_element_type=f32)
                     + jnp.dot(gn, wpb_ref[...], preferred_element_type=f32)
                     + bp_ref[...])              # (L, Dp) f32


# -----------------------------------------------------------------------------
# Stage 2 kernel: label-specific self-attention + relu(e) * proj gating.
# Grid: one "parallel" axis over batch blocks of Bb samples.
# -----------------------------------------------------------------------------
def _attention_gate_kernel(x_ref, nodes_ref, w1_ref, b1_ref, w2_ref, b2_ref,
                           proj_ref, out_ref):
    f32, bf16 = jnp.float32, jnp.bfloat16

    xb = x_ref[...]                              # (Bb, Tp, Dp)  bf16
    Bb, Tp, Dp = xb.shape
    x2 = xb.reshape(Bb * Tp, Dp)                 # layout-free: Tp is a multiple of 16

    h1 = jnp.dot(x2, w1_ref[...], preferred_element_type=f32) + b1_ref[...]            # (Bb*Tp, Hp)
    h2 = jnp.dot(nodes_ref[...], w2_ref[...], preferred_element_type=f32) + b2_ref[...]  # (L, Hp)

    # doc-major scores (Bb*Tp, L): native NT MXU contraction over H (no transposes).
    scores = lax.dot_general(h1.astype(bf16), h2.astype(bf16),
                             (((1,), (1,)), ((), ())),
                             preferred_element_type=f32)                                # (Bb*Tp, L)

    # softmax over the label axis (last axis); EUP approximate reciprocal for the denom.
    m = jnp.max(scores, axis=-1, keepdims=True)
    p = jnp.exp(scores - m)
    att = p * pl.reciprocal(jnp.sum(p, axis=-1, keepdims=True), approx=True)            # (Bb*Tp, L)

    # (Bb*Tp, L) -> (Bb, L, Tp): major-dim split + small minor-dim transpose, then one
    # batched MXU matmul for the whole block (no lane-unaligned per-sample slices).
    att_blt = jnp.swapaxes(att.reshape(Bb, Tp, -1), 1, 2).astype(bf16)                  # (Bb, L, Tp)
    e = jnp.einsum("blt,btd->bld", att_blt, xb, preferred_element_type=f32)             # (Bb, L, Dp)

    proj = proj_ref[...]                                                                # (L, Dp) f32
    out_ref[...] = (jnp.maximum(e, 0.0) * proj[None, :, :]).astype(out_ref.dtype)


# -----------------------------------------------------------------------------
# Padding helpers + one-time parameter preparation (hoisted out of the forward).
# -----------------------------------------------------------------------------
def _round_up(n, m):
    return ((n + m - 1) // m) * m


def _pad_last(a, c):
    return jnp.pad(a, [(0, 0)] * (a.ndim - 1) + [(0, c - a.shape[-1])])


def _pad_last2(a, r, c):
    return jnp.pad(a, [(0, 0)] * (a.ndim - 2)
                   + [(0, r - a.shape[-2]), (0, c - a.shape[-1])])


def prepare_params(params):
    """One-time padding / casting of module weights (not on the per-call path).

    Zero padding is mathematically inert: padded weight rows multiply zero-padded
    activation columns and padded output columns are sliced off in the wrapper.
    """
    f32, bf16 = jnp.float32, jnp.bfloat16
    D, H = params["w1"].shape
    F2 = params["w2"].shape[0]
    Dp, Hp, F2p = _round_up(D, 128), _round_up(H, 128), _round_up(F2, 128)
    return {
        # attention side: bf16 MXU operands, f32 biases
        "w1": _pad_last2(params["w1"], Dp, Hp).astype(bf16),        # (Dp, Hp)
        "b1": _pad_last(params["b1"], Hp).astype(f32),              # (1, Hp)
        "w2": _pad_last2(params["w2"], F2p, Hp).astype(bf16),       # (F2p, Hp)
        "b2": _pad_last(params["b2"], Hp).astype(f32),              # (1, Hp)
        # label-graph side: kept f32 (tiny, run once per forward -> better accuracy)
        "wg": _pad_last2(params["wg"], F2p, F2p).astype(f32),       # (nl, F2p, F2p)
        "bg": _pad_last(params["bg"], F2p).astype(f32),             # (nl, 1, F2p)
        "wpa": _pad_last2(params["wp"][:F2], F2p, Dp).astype(f32),  # (F2p, Dp)  acts on nodes
        "wpb": _pad_last2(params["wp"][F2:], F2p, Dp).astype(f32),  # (F2p, Dp)  acts on gcn out
        "bp": _pad_last(params["bp"], Dp).astype(f32),              # (1, Dp)
    }


# -----------------------------------------------------------------------------
# Forward wrapper: two pallas_calls (label graph once, attention over batch grid).
# -----------------------------------------------------------------------------
def zagcnn_forward(x, nodes, adj_norm, prepared, *, batch_block=32):
    B, T, D = x.shape
    L, _ = nodes.shape
    f32, bf16 = jnp.float32, jnp.bfloat16

    Dp, _ = prepared["w1"].shape
    F2p = prepared["w2"].shape[0]
    Tp = _round_up(T, 16)                        # bf16 sublane packing

    nodes_f32 = _pad_last(nodes, F2p).astype(f32)            # (L, F2p)
    nodes_bf16 = nodes_f32.astype(bf16)
    adj_f32 = adj_norm.astype(f32)                           # (L, L)

    vmem_full = pl.BlockSpec(memory_space=pltpu.MemorySpace.VMEM)

    # ---- stage 1: label graph (GCN x3) + projection, computed ONCE per forward ----
    proj = pl.pallas_call(
        _label_graph_kernel,
        out_shape=jax.ShapeDtypeStruct((L, Dp), f32),
        in_specs=[vmem_full] * 7,
        out_specs=vmem_full,
    )(nodes_f32, adj_f32, prepared["wg"], prepared["bg"],
      prepared["wpa"], prepared["wpb"], prepared["bp"])

    # ---- stage 2: label-specific attention + gating, grid over batch blocks ----
    xp = jnp.pad(x, ((0, 0), (0, Tp - T), (0, Dp - D))).astype(bf16)   # (B, Tp, Dp)

    # >= 2 grid steps whenever B >= 2 so both v7x TensorCores get work; batch_block
    # keeps M = Bb*Tp large (>= 256) for the v6e/v7x MXU on bigger batches.
    Bb = max(1, min(batch_block, pl.cdiv(B, 2)))
    grid = (pl.cdiv(B, Bb),)

    out = pl.pallas_call(
        _attention_gate_kernel,
        out_shape=jax.ShapeDtypeStruct((B, L, Dp), bf16),
        grid=grid,
        in_specs=[
            pl.BlockSpec((Bb, Tp, Dp), lambda b: (b, 0, 0)),   # x, pipelined over batch
            vmem_full,   # nodes (bf16)
            vmem_full,   # w1
            vmem_full,   # b1
            vmem_full,   # w2
            vmem_full,   # b2
            vmem_full,   # proj (f32, stage-1 output, VMEM resident)
        ],
        out_specs=pl.BlockSpec((Bb, L, Dp), lambda b: (b, 0, 0)),
        compiler_params=pltpu.CompilerParams(
            dimension_semantics=("parallel",),
            # explicit scoped-VMEM limit: v5e's default is only 16 MiB
            vmem_limit_bytes=32 * 1024 * 1024),
    )(xp, nodes_bf16, prepared["w1"], prepared["b1"],
      prepared["w2"], prepared["b2"], proj)

    # NOTE: when B % Bb != 0 the last grid step runs softmax over Pallas-padded
    # (unspecified) x rows; those rows map to dropped output rows and are benign.
    return out[..., :D].astype(f32)


# -----------------------------------------------------------------------------
# Pure-JAX f32 reference (same math) for a correctness check.
# -----------------------------------------------------------------------------
def zagcnn_reference(x, nodes, adj_norm, params):
    h1 = x @ params["w1"] + params["b1"]                    # (B, T, H)
    h2 = nodes @ params["w2"] + params["b2"]                # (L, H)
    att = jax.nn.softmax(jnp.einsum("bth,lh->btl", h1, h2), axis=-1)
    e = jnp.einsum("btl,btd->bld", att, x)                  # (B, L, D)

    gn = nodes
    for i in range(params["wg"].shape[0]):
        h = adj_norm @ (gn @ params["wg"][i]) + params["bg"][i]
        gn = jnp.where(h > 0, h, 0.01 * h)
    labelvectors = jnp.concatenate([nodes, gn], axis=-1)
    proj = labelvectors @ params["wp"] + params["bp"]
    return jnp.maximum(e, 0.0) * proj[None]


# -----------------------------------------------------------------------------
# Deterministic parameter / input construction
# -----------------------------------------------------------------------------
def make_params(key, in_features, in_features2, hidden_features, n_layers):
    ks = jax.random.split(key, 8)

    def init(k, shape, fan_in):
        bound = 1.0 / jnp.sqrt(jnp.float32(fan_in))
        return jax.random.uniform(k, shape, jnp.float32, -bound, bound)

    return {
        # NC_LabelSpecificSelfAttention linear layers
        "w1": init(ks[0], (in_features, hidden_features), in_features),
        "b1": init(ks[1], (1, hidden_features), in_features),
        "w2": init(ks[2], (in_features2, hidden_features), in_features2),
        "b2": init(ks[3], (1, hidden_features), in_features2),
        # GCNConv weights (stacked over propagation layers)
        "wg": init(ks[4], (n_layers, in_features2, in_features2), in_features2),
        "bg": init(ks[5], (n_layers, 1, in_features2), in_features2),
        # projection: Linear(in_features2 * 2 -> in_features), stored as (2*F2, D)
        "wp": init(ks[6], (2 * in_features2, in_features), 2 * in_features2),
        "bp": init(ks[7], (1, in_features), 2 * in_features2),
    }


def normalized_adjacency(edge_index, num_nodes):
    """Dense symmetric-normalized adjacency with self loops (GCNConv norm)."""
    src, dst = edge_index
    a = jnp.zeros((num_nodes, num_nodes), jnp.float32)
    a = a.at[src, dst].set(1.0)
    a = a.at[dst, src].set(1.0)                 # symmetrize
    a = a + jnp.eye(num_nodes, dtype=jnp.float32)
    a = jnp.minimum(a, 1.0)
    deg = jnp.sum(a, axis=-1)
    dinv = 1.0 / jnp.sqrt(deg)
    return a * dinv[:, None] * dinv[None, :]


if __name__ == "__main__":
    # small shapes: batch=2, seq=8, in_features=32, labels=16, in_features2=16, hidden=32
    B, T, D = 2, 8, 32
    L, F2, H = 16, 16, 32
    N_LAYERS = 3

    key = jax.random.PRNGKey(0)
    k_x, k_n, k_e, k_p = jax.random.split(key, 4)

    x = jax.random.normal(k_x, (B, T, D), jnp.float32)
    nodes = jax.random.normal(k_n, (L, F2), jnp.float32)

    # deterministic small label graph as an edge_index (2, E)
    src = jnp.arange(L - 1, dtype=jnp.int32)
    dst = src + 1
    extra_src = jnp.array([0, 2, 5, 7], dtype=jnp.int32)
    extra_dst = jnp.array([8, 11, 13, 15], dtype=jnp.int32)
    edge_index = jnp.stack([jnp.concatenate([src, extra_src]),
                            jnp.concatenate([dst, extra_dst])])
    adj_norm = normalized_adjacency(edge_index, L)

    params = make_params(k_p, D, F2, H, N_LAYERS)
    prepared = prepare_params(params)            # one-time pad / cast (off the hot path)

    out = jax.jit(zagcnn_forward)(x, nodes, adj_norm, prepared)
    out = jax.block_until_ready(out)

    ref = zagcnn_reference(x, nodes, adj_norm, params)
    assert out.shape == (B, L, D)
    # bf16 MXU operands / bf16 output + approximate reciprocal vs pure-f32 reference.
    assert jnp.allclose(out, ref, atol=5e-2, rtol=5e-2), "mismatch vs reference"

    print("KERNEL_OK")
</pallas_src>

<mosaic_0001>
module attributes {stable_mosaic.version = 11 : i64} {
  func.func @_label_graph_kernel(%arg0: memref<16x128xf32, #tpu.memory_space<vmem>>, %arg1: memref<16x16xf32, #tpu.memory_space<vmem>>, %arg2: memref<3x128x128xf32, #tpu.memory_space<vmem>>, %arg3: memref<3x1x128xf32, #tpu.memory_space<vmem>>, %arg4: memref<128x128xf32, #tpu.memory_space<vmem>>, %arg5: memref<128x128xf32, #tpu.memory_space<vmem>>, %arg6: memref<1x128xf32, #tpu.memory_space<vmem>>, %arg7: memref<16x128xf32, #tpu.memory_space<vmem>>) attributes {dimension_semantics = [], scalar_prefetch = 0 : i64, scratch_operands = 0 : i64, tpu.core_type = #tpu.core_type<tc>} {
    %c0 = arith.constant 0 : index
    %c0_0 = arith.constant 0 : index
    %0 = vector.load %arg0[%c0, %c0_0] : memref<16x128xf32, #tpu.memory_space<vmem>>, vector<16x128xf32>
    %c0_1 = arith.constant 0 : index
    %c0_2 = arith.constant 0 : index
    %1 = vector.load %arg1[%c0_1, %c0_2] : memref<16x16xf32, #tpu.memory_space<vmem>>, vector<16x16xf32>
    %cst = arith.constant dense<0.000000e+00> : vector<16x128xf32>
    %2 = tpu.matmul %1, %0, %cst {dimension_numbers = #tpu.dot_dimension_numbers<[1], [0], [0], [1], [0, 0, 1, 1], [], []>} : vector<16x16xf32>, vector<16x128xf32>, vector<16x128xf32> -> vector<16x128xf32>
    %c0_3 = arith.constant 0 : index
    %c0_4 = arith.constant 0 : index
    %c0_5 = arith.constant 0 : index
    %3 = vector.load %arg2[%c0_3, %c0_4, %c0_5] : memref<3x128x128xf32, #tpu.memory_space<vmem>>, vector<1x128x128xf32>
    %4 = vector.shape_cast %3 : vector<1x128x128xf32> to vector<128x128xf32>
    %cst_6 = arith.constant dense<0.000000e+00> : vector<16x128xf32>
    %5 = tpu.matmul %2, %4, %cst_6 {dimension_numbers = #tpu.dot_dimension_numbers<[1], [0], [0], [1], [0, 0, 1, 1], [], []>} : vector<16x128xf32>, vector<128x128xf32>, vector<16x128xf32> -> vector<16x128xf32>
    %c0_7 = arith.constant 0 : index
    %c0_8 = arith.constant 0 : index
    %c0_9 = arith.constant 0 : index
    %6 = vector.load %arg3[%c0_7, %c0_8, %c0_9] : memref<3x1x128xf32, #tpu.memory_space<vmem>>, vector<1x1x128xf32>
    %7 = vector.shape_cast %6 : vector<1x1x128xf32> to vector<1x128xf32>
    %8 = vector.broadcast %7 : vector<1x128xf32> to vector<16x128xf32>
    %9 = arith.addf %5, %8 : vector<16x128xf32>
    %cst_10 = arith.constant 0.000000e+00 : f32
    %10 = vector.broadcast %cst_10 : f32 to vector<16x128xf32>
    %11 = arith.cmpf ogt, %9, %10 : vector<16x128xf32>
    %cst_11 = arith.constant 0.00999999977 : f32
    %12 = vector.broadcast %cst_11 : f32 to vector<16x128xf32>
    %13 = arith.mulf %12, %9 : vector<16x128xf32>
    %14 = arith.select %11, %9, %13 : vector<16x128xi1>, vector<16x128xf32>
    %cst_12 = arith.constant dense<0.000000e+00> : vector<16x128xf32>
    %15 = tpu.matmul %1, %14, %cst_12 {dimension_numbers = #tpu.dot_dimension_numbers<[1], [0], [0], [1], [0, 0, 1, 1], [], []>} : vector<16x16xf32>, vector<16x128xf32>, vector<16x128xf32> -> vector<16x128xf32>
    %c1 = arith.constant 1 : index
    %c0_13 = arith.constant 0 : index
    %c0_14 = arith.constant 0 : index
    %16 = vector.load %arg2[%c1, %c0_13, %c0_14] : memref<3x128x128xf32, #tpu.memory_space<vmem>>, vector<1x128x128xf32>
    %17 = vector.shape_cast %16 : vector<1x128x128xf32> to vector<128x128xf32>
    %cst_15 = arith.constant dense<0.000000e+00> : vector<16x128xf32>
    %18 = tpu.matmul %15, %17, %cst_15 {dimension_numbers = #tpu.dot_dimension_numbers<[1], [0], [0], [1], [0, 0, 1, 1], [], []>} : vector<16x128xf32>, vector<128x128xf32>, vector<16x128xf32> -> vector<16x128xf32>
    %c1_16 = arith.constant 1 : index
    %c0_17 = arith.constant 0 : index
    %c0_18 = arith.constant 0 : index
    %19 = vector.load %arg3[%c1_16, %c0_17, %c0_18] : memref<3x1x128xf32, #tpu.memory_space<vmem>>, vector<1x1x128xf32>
    %20 = vector.shape_cast %19 : vector<1x1x128xf32> to vector<1x128xf32>
    %21 = vector.broadcast %20 : vector<1x128xf32> to vector<16x128xf32>
    %22 = arith.addf %18, %21 : vector<16x128xf32>
    %cst_19 = arith.constant 0.000000e+00 : f32
    %23 = vector.broadcast %cst_19 : f32 to vector<16x128xf32>
    %24 = arith.cmpf ogt, %22, %23 : vector<16x128xf32>
    %cst_20 = arith.constant 0.00999999977 : f32
    %25 = vector.broadcast %cst_20 : f32 to vector<16x128xf32>
    %26 = arith.mulf %25, %22 : vector<16x128xf32>
    %27 = arith.select %24, %22, %26 : vector<16x128xi1>, vector<16x128xf32>
    %cst_21 = arith.constant dense<0.000000e+00> : vector<16x128xf32>
    %28 = tpu.matmul %1, %27, %cst_21 {dimension_numbers = #tpu.dot_dimension_numbers<[1], [0], [0], [1], [0, 0, 1, 1], [], []>} : vector<16x16xf32>, vector<16x128xf32>, vector<16x128xf32> -> vector<16x128xf32>
    %c2 = arith.constant 2 : index
    %c0_22 = arith.constant 0 : index
    %c0_23 = arith.constant 0 : index
    %29 = vector.load %arg2[%c2, %c0_22, %c0_23] : memref<3x128x128xf32, #tpu.memory_space<vmem>>, vector<1x128x128xf32>
    %30 = vector.shape_cast %29 : vector<1x128x128xf32> to vector<128x128xf32>
    %cst_24 = arith.constant dense<0.000000e+00> : vector<16x128xf32>
    %31 = tpu.matmul %28, %30, %cst_24 {dimension_numbers = #tpu.dot_dimension_numbers<[1], [0], [0], [1], [0, 0, 1, 1], [], []>} : vector<16x128xf32>, vector<128x128xf32>, vector<16x128xf32> -> vector<16x128xf32>
    %c2_25 = arith.constant 2 : index
    %c0_26 = arith.constant 0 : index
    %c0_27 = arith.constant 0 : index
    %32 = vector.load %arg3[%c2_25, %c0_26, %c0_27] : memref<3x1x128xf32, #tpu.memory_space<vmem>>, vector<1x1x128xf32>
    %33 = vector.shape_cast %32 : vector<1x1x128xf32> to vector<1x128xf32>
    %34 = vector.broadcast %33 : vector<1x128xf32> to vector<16x128xf32>
    %35 = arith.addf %31, %34 : vector<16x128xf32>
    %cst_28 = arith.constant 0.000000e+00 : f32
    %36 = vector.broadcast %cst_28 : f32 to vector<16x128xf32>
    %37 = arith.cmpf ogt, %35, %36 : vector<16x128xf32>
    %cst_29 = arith.constant 0.00999999977 : f32
    %38 = vector.broadcast %cst_29 : f32 to vector<16x128xf32>
    %39 = arith.mulf %38, %35 : vector<16x128xf32>
    %40 = arith.select %37, %35, %39 : vector<16x128xi1>, vector<16x128xf32>
    %c0_30 = arith.constant 0 : index
    %c0_31 = arith.constant 0 : index
    %41 = vector.load %arg4[%c0_30, %c0_31] : memref<128x128xf32, #tpu.memory_space<vmem>>, vector<128x128xf32>
    %cst_32 = arith.constant dense<0.000000e+00> : vector<16x128xf32>
    %42 = tpu.matmul %0, %41, %cst_32 {dimension_numbers = #tpu.dot_dimension_numbers<[1], [0], [0], [1], [0, 0, 1, 1], [], []>} : vector<16x128xf32>, vector<128x128xf32>, vector<16x128xf32> -> vector<16x128xf32>
    %c0_33 = arith.constant 0 : index
    %c0_34 = arith.constant 0 : index
    %43 = vector.load %arg5[%c0_33, %c0_34] : memref<128x128xf32, #tpu.memory_space<vmem>>, vector<128x128xf32>
    %cst_35 = arith.constant dense<0.000000e+00> : vector<16x128xf32>
    %44 = tpu.matmul %40, %43, %cst_35 {dimension_numbers = #tpu.dot_dimension_numbers<[1], [0], [0], [1], [0, 0, 1, 1], [], []>} : vector<16x128xf32>, vector<128x128xf32>, vector<16x128xf32> -> vector<16x128xf32>
    %45 = arith.addf %42, %44 : vector<16x128xf32>
    %c0_36 = arith.constant 0 : index
    %c0_37 = arith.constant 0 : index
    %46 = vector.load %arg6[%c0_36, %c0_37] : memref<1x128xf32, #tpu.memory_space<vmem>>, vector<1x128xf32>
    %47 = vector.broadcast %46 : vector<1x128xf32> to vector<16x128xf32>
    %48 = arith.addf %45, %47 : vector<16x128xf32>
    %c0_38 = arith.constant 0 : index
    %c0_39 = arith.constant 0 : index
    %49 = vector.load %arg7[%c0_38, %c0_39] : memref<16x128xf32, #tpu.memory_space<vmem>>, vector<16x128xf32>
    tpu.vector_store %arg7[%c0_38, %c0_39], %48 {strides = array<i32>} : memref<16x128xf32, #tpu.memory_space<vmem>>, vector<16x128xf32>,
    return
  }
}

module attributes {stable_mosaic.version = 11 : i64} {
  func.func @_attention_gate_kernel(%arg0: i32, %arg1: memref<1x16x128xbf16, #tpu.memory_space<vmem>>, %arg2: memref<16x128xbf16, #tpu.memory_space<vmem>>, %arg3: memref<128x128xbf16, #tpu.memory_space<vmem>>, %arg4: memref<1x128xf32, #tpu.memory_space<vmem>>, %arg5: memref<128x128xbf16, #tpu.memory_space<vmem>>, %arg6: memref<1x128xf32, #tpu.memory_space<vmem>>, %arg7: memref<16x128xf32, #tpu.memory_space<vmem>>, %arg8: memref<1x16x128xbf16, #tpu.memory_space<vmem>>) attributes {dimension_semantics = [#tpu.dimension_semantics<parallel>], iteration_bounds = array<i64: 2>, scalar_prefetch = 0 : i64, scratch_operands = 0 : i64, tpu.core_type = #tpu.core_type<tc>, window_params = [{transform_indices = @transform_0, window_bounds = array<i64: 1, 16, 128>}, {pipeline_mode = #tpu.pipeline_mode<synchronous>, transform_indices = @transform_1, window_bounds = array<i64: 16, 128>}, {pipeline_mode = #tpu.pipeline_mode<synchronous>, transform_indices = @transform_2, window_bounds = array<i64: 128, 128>}, {pipeline_mode = #tpu.pipeline_mode<synchronous>, transform_indices = @transform_3, window_bounds = array<i64: 1, 128>}, {pipeline_mode = #tpu.pipeline_mode<synchronous>, transform_indices = @transform_4, window_bounds = array<i64: 128, 128>}, {pipeline_mode = #tpu.pipeline_mode<synchronous>, transform_indices = @transform_5, window_bounds = array<i64: 1, 128>}, {pipeline_mode = #tpu.pipeline_mode<synchronous>, transform_indices = @transform_6, window_bounds = array<i64: 16, 128>}, {transform_indices = @transform_7, window_bounds = array<i64: 1, 16, 128>}]} {
    %c0 = arith.constant 0 : index
    %c0_0 = arith.constant 0 : index
    %c0_1 = arith.constant 0 : index
    %0 = vector.load %arg1[%c0, %c0_0, %c0_1] : memref<1x16x128xbf16, #tpu.memory_space<vmem>>, vector<1x16x128xbf16>
    %1 = vector.shape_cast %0 : vector<1x16x128xbf16> to vector<16x128xbf16>
    %c0_2 = arith.constant 0 : index
    %c0_3 = arith.constant 0 : index
    %2 = vector.load %arg3[%c0_2, %c0_3] : memref<128x128xbf16, #tpu.memory_space<vmem>>, vector<128x128xbf16>
    %cst = arith.constant dense<0.000000e+00> : vector<16x128xf32>
    %3 = tpu.matmul %1, %2, %cst {dimension_numbers = #tpu.dot_dimension_numbers<[1], [0], [0], [1], [0, 0, 1, 1], [], []>} : vector<16x128xbf16>, vector<128x128xbf16>, vector<16x128xf32> -> vector<16x128xf32>
    %c0_4 = arith.constant 0 : index
    %c0_5 = arith.constant 0 : index
    %4 = vector.load %arg4[%c0_4, %c0_5] : memref<1x128xf32, #tpu.memory_space<vmem>>, vector<1x128xf32>
    %5 = vector.broadcast %4 : vector<1x128xf32> to vector<16x128xf32>
    %6 = arith.addf %3, %5 : vector<16x128xf32>
    %c0_6 = arith.constant 0 : index
    %c0_7 = arith.constant 0 : index
    %7 = vector.load %arg2[%c0_6, %c0_7] : memref<16x128xbf16, #tpu.memory_space<vmem>>, vector<16x128xbf16>
    %c0_8 = arith.constant 0 : index
    %c0_9 = arith.constant 0 : index
    %8 = vector.load %arg5[%c0_8, %c0_9] : memref<128x128xbf16, #tpu.memory_space<vmem>>, vector<128x128xbf16>
    %cst_10 = arith.constant dense<0.000000e+00> : vector<16x128xf32>
    %9 = tpu.matmul %7, %8, %cst_10 {dimension_numbers = #tpu.dot_dimension_numbers<[1], [0], [0], [1], [0, 0, 1, 1], [], []>} : vector<16x128xbf16>, vector<128x128xbf16>, vector<16x128xf32> -> vector<16x128xf32>
    %c0_11 = arith.constant 0 : index
    %c0_12 = arith.constant 0 : index
    %10 = vector.load %arg6[%c0_11, %c0_12] : memref<1x128xf32, #tpu.memory_space<vmem>>, vector<1x128xf32>
    %11 = vector.broadcast %10 : vector<1x128xf32> to vector<16x128xf32>
    %12 = arith.addf %9, %11 : vector<16x128xf32>
    %13 = arith.truncf %6 : vector<16x128xf32> to vector<16x128xbf16>
    %14 = arith.truncf %12 : vector<16x128xf32> to vector<16x128xbf16>
    %cst_13 = arith.constant dense<0.000000e+00> : vector<16x16xf32>
    %15 = tpu.matmul %13, %14, %cst_13 {dimension_numbers = #tpu.dot_dimension_numbers<[1], [1], [0], [0], [0, 0, 1, 0], [], []>} : vector<16x128xbf16>, vector<16x128xbf16>, vector<16x16xf32> -> vector<16x16xf32>
    %cst_14 = arith.constant dense<0xFF800000> : vector<16xf32>
    %16 = vector.multi_reduction <maximumf>, %15, %cst_14 [1] : vector<16x16xf32> to vector<16xf32>
    %17 = vector.shape_cast %16 : vector<16xf32> to vector<16x1xf32>
    %18 = vector.broadcast %17 : vector<16x1xf32> to vector<16x16xf32>
    %19 = arith.subf %15, %18 : vector<16x16xf32>
    %20 = math.exp %19 : vector<16x16xf32>
    %cst_15 = arith.constant dense<0.000000e+00> : vector<16xf32>
    %21 = vector.multi_reduction <add>, %20, %cst_15 [1] : vector<16x16xf32> to vector<16xf32>
    %22 = vector.shape_cast %21 : vector<16xf32> to vector<16x1xf32>
    %23 = tpu.reciprocal %22 {approx = true} : vector<16x1xf32> -> vector<16x1xf32>
    %24 = vector.broadcast %23 : vector<16x1xf32> to vector<16x16xf32>
    %25 = arith.mulf %20, %24 : vector<16x16xf32>
    %26 = vector.shape_cast %25 : vector<16x16xf32> to vector<1x16x16xf32>
    %27 = tpu.transpose %26, [0, 2, 1] : vector<1x16x16xf32> -> vector<1x16x16xf32>
    %28 = arith.truncf %27 : vector<1x16x16xf32> to vector<1x16x16xbf16>
    "tpu.trace_start"() <{level = 10 : i32, message = "blt,btd->bld"}> : () -> ()
    %cst_16 = arith.constant dense<0.000000e+00> : vector<1x16x128xf32>
    %29 = tpu.matmul %28, %0, %cst_16 {dimension_numbers = #tpu.dot_dimension_numbers<[2], [1], [1], [2], [0, 0, 0, 1, 1, 2], [0], [0]>} : vector<1x16x16xbf16>, vector<1x16x128xbf16>, vector<1x16x128xf32> -> vector<1x16x128xf32>
    "tpu.trace_stop"() : () -> ()
    %c0_17 = arith.constant 0 : index
    %c0_18 = arith.constant 0 : index
    %30 = vector.load %arg7[%c0_17, %c0_18] : memref<16x128xf32, #tpu.memory_space<vmem>>, vector<16x128xf32>
    %cst_19 = arith.constant 0.000000e+00 : f32
    %31 = vector.broadcast %cst_19 : f32 to vector<1x16x128xf32>
    %32 = arith.maximumf %29, %31 : vector<1x16x128xf32>
    %33 = vector.shape_cast %30 : vector<16x128xf32> to vector<1x16x128xf32>
    %34 = arith.mulf %32, %33 : vector<1x16x128xf32>
    %35 = arith.truncf %34 : vector<1x16x128xf32> to vector<1x16x128xbf16>
    %c0_20 = arith.constant 0 : index
    %c0_21 = arith.constant 0 : index
    %c0_22 = arith.constant 0 : index
    %36 = vector.load %arg8[%c0_20, %c0_21, %c0_22] : memref<1x16x128xbf16, #tpu.memory_space<vmem>>, vector<1x16x128xbf16>
    tpu.vector_store %arg8[%c0_20, %c0_21, %c0_22], %35 {strides = array<i32>} : memref<1x16x128xbf16, #tpu.memory_space<vmem>>, vector<1x16x128xbf16>,
    return
  }
  func.func @transform_0(%arg0: i32) -> (i32, i32, i32) {
    %c0_i32 = arith.constant 0 : i32
    %c0_i32_0 = arith.constant 0 : i32
    %c0_i32_1 = arith.constant 0 : i32
    return %arg0, %c0_i32, %c0_i32_0 : i32, i32, i32
  }
  func.func @transform_1(%arg0: i32) -> (i32, i32) {
    %c0_i32 = arith.constant 0 : i32
    %c0_i32_0 = arith.constant 0 : i32
    %c0_i32_1 = arith.constant 0 : i32
    return %c0_i32, %c0_i32_0 : i32, i32
  }
  func.func @transform_2(%arg0: i32) -> (i32, i32) {
    %c0_i32 = arith.constant 0 : i32
    %c0_i32_0 = arith.constant 0 : i32
    %c0_i32_1 = arith.constant 0 : i32
    return %c0_i32, %c0_i32_0 : i32, i32
  }
  func.func @transform_3(%arg0: i32) -> (i32, i32) {
    %c0_i32 = arith.constant 0 : i32
    %c0_i32_0 = arith.constant 0 : i32
    %c0_i32_1 = arith.constant 0 : i32
    return %c0_i32, %c0_i32_0 : i32, i32
  }
  func.func @transform_4(%arg0: i32) -> (i32, i32) {
    %c0_i32 = arith.constant 0 : i32
    %c0_i32_0 = arith.constant 0 : i32
    %c0_i32_1 = arith.constant 0 : i32
    return %c0_i32, %c0_i32_0 : i32, i32
  }
  func.func @transform_5(%arg0: i32) -> (i32, i32) {
    %c0_i32 = arith.constant 0 : i32
    %c0_i32_0 = arith.constant 0 : i32
    %c0_i32_1 = arith.constant 0 : i32
    return %c0_i32, %c0_i32_0 : i32, i32
  }
  func.func @transform_6(%arg0: i32) -> (i32, i32) {
    %c0_i32 = arith.constant 0 : i32
    %c0_i32_0 = arith.constant 0 : i32
    %c0_i32_1 = arith.constant 0 : i32
    return %c0_i32, %c0_i32_0 : i32, i32
  }
  func.func @transform_7(%arg0: i32) -> (i32, i32, i32) {
    %c0_i32 = arith.constant 0 : i32
    %c0_i32_0 = arith.constant 0 : i32
    %c0_i32_1 = arith.constant 0 : i32
    return %arg0, %c0_i32, %c0_i32_0 : i32, i32, i32
  }
}

</mosaic_0001>

<llo_original>
// kernel: zagcnn_forward.3
$region0: #{zagcnn_forward.3}
  #allocation0 [shape = 'u32[]', space=smem, size = 0x4, offset = 0x4, fixed_abs, tag = 'smem constant byte address 0x4 - core index']
  #allocation1 [shape = 'u32[144,128]{1,0:T(1,128)}', space=vmem, size = 0x12000, scoped, tag = 'internal scratch']
  %s0 = inlined_call_operand.vmem [shape: bf16[2,16,128], index: 0, kind: input, shape index: {}]
  %s1 = inlined_call_operand.vmem [shape: bf16[16,128], index: 1, kind: input, shape index: {}]
  %s2 = inlined_call_operand.vmem [shape: bf16[128,128], index: 2, kind: input, shape index: {}]
  %s3 = inlined_call_operand.vmem [shape: f32[1,128], index: 3, kind: input, shape index: {}]
  %s4 = inlined_call_operand.vmem [shape: bf16[128,128], index: 4, kind: input, shape index: {}]
  %s5 = inlined_call_operand.vmem [shape: f32[1,128], index: 5, kind: input, shape index: {}]
  %s6 = inlined_call_operand.vmem [shape: f32[16,128], index: 6, kind: input, shape index: {}]
  %s7 = inlined_call_operand.vmem [shape: bf16[2,16,128], index: 7, kind: output, shape index: {}]
  %s8 = sld [smem:[#allocation0]]
  $region61: #{zagcnn_forward.3} parent=0
    _
  %s10 = ssub.s32 1, %s8
  %s11 = scalar_select 0, %s10, %s8
  loop: start=0, step=1, limit=4
  $region2: #{zagcnn_forward.3} parent=0 // loop_pre_header
    _
  $region3: #{zagcnn_forward.3} parent=0 // loop_header
    %s13 = sphi 0, %s17
    %p14 = scmp.ge.s32.totalorder %s13, 4
    %s23 = sphi 0, %s25
    %s26 = sphi 0, %s23
    %s27 = sphi 0, %s26
    %s43 = sphi 0, %s27
    %s47 = sphi 0, %s47
    %s49 = sphi 0, %s47
    %s50 = sphi 0, %s49
    %s64 = sphi 0, %s50
    %s68 = sphi 0, %s68
    %s70 = sphi 0, %s68
    %s71 = sphi 0, %s70
    %s85 = sphi 0, %s71
    %s89 = sphi 0, %s89
    %s91 = sphi 0, %s89
    %s92 = sphi 0, %s91
    %s106 = sphi 0, %s92
    %s110 = sphi 0, %s110
    %s112 = sphi 0, %s110
    %s113 = sphi 0, %s112
    %s127 = sphi 0, %s113
    %s131 = sphi 0, %s131
    %s133 = sphi 0, %s131
    %s134 = sphi 0, %s133
    %s148 = sphi 0, %s134
    %s152 = sphi 0, %s152
    %s154 = sphi 0, %s152
    %s155 = sphi 0, %s154
    %s169 = sphi 0, %s155
    %s175 = sphi 0, %s177
    %s178 = sphi 0, %s175
    %s179 = sphi 0, %s178
    %s195 = sphi 0, %s179
  $region4: #{zagcnn_forward.3} parent=0 // loop_header_branch
    %16 = sbr.rel (%p14) target = $region8
  $region5: #{zagcnn_forward.3} parent=0 // loop_body
    %s18 = ssub.s32 %s13, 1
    %s19 = ssub.s32 %s13, 2
    %s20 = sadd.s32 %s13, 1
    %s21 = ssub.s32 %s13, %s20
    %p22 = scmp.eq.s32.totalorder %s21, 0
    %s24 = sadd.s32 %s23, 1
    %s25 = scalar_select %p22, %s23, %s24
    %p28 = pneg %p22
    %p29 = scmp.eq.s32.totalorder %s13, 1
    %p30 = por %p28, %p29
    %p31 = scmp.ne.s32.totalorder %s23, %s26
    %p32 = scmp.eq.s32.totalorder %s13, 0
    %p33 = por %p31, %p32
    %p34 = scmp.ne.s32.totalorder %s23, %s26
    %p35 = scmp.eq.s32.totalorder %s18, 1
    %p36 = por %p34, %p35
    %p37 = scmp.ne.s32.totalorder %s26, %s27
    %p38 = scmp.eq.s32.totalorder %s18, 0
    %p39 = por %p37, %p38
    %p40 = scmp.ne.s32.totalorder %s26, %s27
    %p41 = scmp.eq.s32.totalorder %s19, 1
    %p42 = por %p40, %p41
    %p44 = scmp.ne.s32.totalorder %s27, %s43
    %p45 = scmp.eq.s32.totalorder %s19, 0
    %p46 = por %p44, %p45
    %s48 = sadd.s32 %s47, 1
    %p51 = scmp.eq.s32.totalorder %s13, 1
    %p52 = scmp.ne.s32.totalorder %s47, %s49
    %p53 = scmp.eq.s32.totalorder %s13, 0
    %p54 = por %p52, %p53
    %p55 = scmp.ne.s32.totalorder %s47, %s49
    %p56 = scmp.eq.s32.totalorder %s18, 1
    %p57 = por %p55, %p56
    %p58 = scmp.ne.s32.totalorder %s49, %s50
    %p59 = scmp.eq.s32.totalorder %s18, 0
    %p60 = por %p58, %p59
    %p61 = scmp.ne.s32.totalorder %s49, %s50
    %p62 = scmp.eq.s32.totalorder %s19, 1
    %p63 = por %p61, %p62
    %p65 = scmp.ne.s32.totalorder %s50, %s64
    %p66 = scmp.eq.s32.totalorder %s19, 0
    %p67 = por %p65, %p66
    %s69 = sadd.s32 %s68, 1
    %p72 = scmp.eq.s32.totalorder %s13, 1
    %p73 = scmp.ne.s32.totalorder %s68, %s70
    %p74 = scmp.eq.s32.totalorder %s13, 0
    %p75 = por %p73, %p74
    %p76 = scmp.ne.s32.totalorder %s68, %s70
    %p77 = scmp.eq.s32.totalorder %s18, 1
    %p78 = por %p76, %p77
    %p79 = scmp.ne.s32.totalorder %s70, %s71
    %p80 = scmp.eq.s32.totalorder %s18, 0
    %p81 = por %p79, %p80
    %p82 = scmp.ne.s32.totalorder %s70, %s71
    %p83 = scmp.eq.s32.totalorder %s19, 1
    %p84 = por %p82, %p83
    %p86 = scmp.ne.s32.totalorder %s71, %s85
    %p87 = scmp.eq.s32.totalorder %s19, 0
    %p88 = por %p86, %p87
    %s90 = sadd.s32 %s89, 1
    %p93 = scmp.eq.s32.totalorder %s13, 1
    %p94 = scmp.ne.s32.totalorder %s89, %s91
    %p95 = scmp.eq.s32.totalorder %s13, 0
    %p96 = por %p94, %p95
    %p97 = scmp.ne.s32.totalorder %s89, %s91
    %p98 = scmp.eq.s32.totalorder %s18, 1
    %p99 = por %p97, %p98
    %p100 = scmp.ne.s32.totalorder %s91, %s92
    %p101 = scmp.eq.s32.totalorder %s18, 0
    %p102 = por %p100, %p101
    %p103 = scmp.ne.s32.totalorder %s91, %s92
    %p104 = scmp.eq.s32.totalorder %s19, 1
    %p105 = por %p103, %p104
    %p107 = scmp.ne.s32.totalorder %s92, %s106
    %p108 = scmp.eq.s32.totalorder %s19, 0
    %p109 = por %p107, %p108
    %s111 = sadd.s32 %s110, 1
    %p114 = scmp.eq.s32.totalorder %s13, 1
    %p115 = scmp.ne.s32.totalorder %s110, %s112
    %p116 = scmp.eq.s32.totalorder %s13, 0
    %p117 = por %p115, %p116
    %p118 = scmp.ne.s32.totalorder %s110, %s112
    %p119 = scmp.eq.s32.totalorder %s18, 1
    %p120 = por %p118, %p119
    %p121 = scmp.ne.s32.totalorder %s112, %s113
    %p122 = scmp.eq.s32.totalorder %s18, 0
    %p123 = por %p121, %p122
    %p124 = scmp.ne.s32.totalorder %s112, %s113
    %p125 = scmp.eq.s32.totalorder %s19, 1
    %p126 = por %p124, %p125
    %p128 = scmp.ne.s32.totalorder %s113, %s127
    %p129 = scmp.eq.s32.totalorder %s19, 0
    %p130 = por %p128, %p129
    %s132 = sadd.s32 %s131, 1
    %p135 = scmp.eq.s32.totalorder %s13, 1
    %p136 = scmp.ne.s32.totalorder %s131, %s133
    %p137 = scmp.eq.s32.totalorder %s13, 0
    %p138 = por %p136, %p137
    %p139 = scmp.ne.s32.totalorder %s131, %s133
    %p140 = scmp.eq.s32.totalorder %s18, 1
    %p141 = por %p139, %p140
    %p142 = scmp.ne.s32.totalorder %s133, %s134
    %p143 = scmp.eq.s32.totalorder %s18, 0
    %p144 = por %p142, %p143
    %p145 = scmp.ne.s32.totalorder %s133, %s134
    %p146 = scmp.eq.s32.totalorder %s19, 1
    %p147 = por %p145, %p146
    %p149 = scmp.ne.s32.totalorder %s134, %s148
    %p150 = scmp.eq.s32.totalorder %s19, 0
    %p151 = por %p149, %p150
    %s153 = sadd.s32 %s152, 1
    %p156 = scmp.eq.s32.totalorder %s13, 1
    %p157 = scmp.ne.s32.totalorder %s152, %s154
    %p158 = scmp.eq.s32.totalorder %s13, 0
    %p159 = por %p157, %p158
    %p160 = scmp.ne.s32.totalorder %s152, %s154
    %p161 = scmp.eq.s32.totalorder %s18, 1
    %p162 = por %p160, %p161
    %p163 = scmp.ne.s32.totalorder %s154, %s155
    %p164 = scmp.eq.s32.totalorder %s18, 0
    %p165 = por %p163, %p164
    %p166 = scmp.ne.s32.totalorder %s154, %s155
    %p167 = scmp.eq.s32.totalorder %s19, 1
    %p168 = por %p166, %p167
    %p170 = scmp.ne.s32.totalorder %s155, %s169
    %p171 = scmp.eq.s32.totalorder %s19, 0
    %p172 = por %p170, %p171
    %s173 = ssub.s32 %s13, %s20
    %p174 = scmp.eq.s32.totalorder %s173, 0
    %s176 = sadd.s32 %s175, 1
    %s177 = scalar_select %p174, %s175, %s176
    %p180 = pneg %p174
    %p181 = scmp.eq.s32.totalorder %s13, 1
    %p182 = por %p180, %p181
    %p183 = scmp.ne.s32.totalorder %s175, %s178
    %p184 = scmp.eq.s32.totalorder %s13, 0
    %p185 = por %p183, %p184
    %p186 = scmp.ne.s32.totalorder %s175, %s178
    %p187 = scmp.eq.s32.totalorder %s18, 1
    %p188 = por %p186, %p187
    %p189 = scmp.ne.s32.totalorder %s178, %s179
    %p190 = scmp.eq.s32.totalorder %s18, 0
    %p191 = por %p189, %p190
    %p192 = scmp.ne.s32.totalorder %s178, %s179
    %p193 = scmp.eq.s32.totalorder %s19, 1
    %p194 = por %p192, %p193
    %p196 = scmp.ne.s32.totalorder %s179, %s195
    %p197 = scmp.eq.s32.totalorder %s19, 0
    %p198 = por %p196, %p197
    %p199 = scmp.le.s32.totalorder 1, %s13
    %p200 = scmp.lt.s32.totalorder %s13, 3
    %p201 = pnand %p199, %p200
    %p202 = pneg %p201
    // Predicated region
    $region9: #{zagcnn_forward.3} parent=5 // pred_check
      _
    $region10: #{zagcnn_forward.3} parent=5 // pred_check_branch
      %204 = sbr.rel (%p201) target = $region12
    $region11: #{zagcnn_forward.3} parent=5 // pred_region
      %s205 = ssub.s32 %s13, 1
      // Predicated region
      $region13: #{zagcnn_forward.3} parent=11 // pred_check
        %p206 = pneg %p60
      $region14: #{zagcnn_forward.3} parent=11 // pred_check_branch
        %208 = sbr.rel (%p206) target = $region16
      $region15: #{zagcnn_forward.3} parent=11 // pred_region
        _
      $region16: #{zagcnn_forward.3} parent=11 // pred_fallthru
        _
      // Predicated region
      $region17: #{zagcnn_forward.3} parent=11 // pred_check
        %p209 = pneg %p81
      $region18: #{zagcnn_forward.3} parent=11 // pred_check_branch
        %211 = sbr.rel (%p209) target = $region20
      $region19: #{zagcnn_forward.3} parent=11 // pred_region
        _
      $region20: #{zagcnn_forward.3} parent=11 // pred_fallthru
        _
      // Predicated region
      $region21: #{zagcnn_forward.3} parent=11 // pred_check
        %p212 = pneg %p102
      $region22: #{zagcnn_forward.3} parent=11 // pred_check_branch
        %214 = sbr.rel (%p212) target = $region24
      $region23: #{zagcnn_forward.3} parent=11 // pred_region
        _
      $region24: #{zagcnn_forward.3} parent=11 // pred_fallthru
        _
      // Predicated region
      $region25: #{zagcnn_forward.3} parent=11 // pred_check
        %p215 = pneg %p123
      $region26: #{zagcnn_forward.3} parent=11 // pred_check_branch
        %217 = sbr.rel (%p215) target = $region28
      $region27: #{zagcnn_forward.3} parent=11 // pred_region
        _
      $region28: #{zagcnn_forward.3} parent=11 // pred_fallthru
        _
      // Predicated region
      $region29: #{zagcnn_forward.3} parent=11 // pred_check
        %p218 = pneg %p144
      $region30: #{zagcnn_forward.3} parent=11 // pred_check_branch
        %220 = sbr.rel (%p218) target = $region32
      $region31: #{zagcnn_forward.3} parent=11 // pred_region
        _
      $region32: #{zagcnn_forward.3} parent=11 // pred_fallthru
        _
      // Predicated region
      $region33: #{zagcnn_forward.3} parent=11 // pred_check
        %p221 = pneg %p165
      $region34: #{zagcnn_forward.3} parent=11 // pred_check_branch
        %223 = sbr.rel (%p221) target = $region36
      $region35: #{zagcnn_forward.3} parent=11 // pred_region
        _
      $region36: #{zagcnn_forward.3} parent=11 // pred_fallthru
        _
    $region12: #{zagcnn_forward.3} parent=5 // pred_fallthru
      _
    %p224 = scmp.lt.s32.totalorder %s13, 2
    // Predicated region
    $region37: #{zagcnn_forward.3} parent=5 // pred_check
      %p225 = pneg %p224
    $region38: #{zagcnn_forward.3} parent=5 // pred_check_branch
      %227 = sbr.rel (%p225) target = $region40
    $region39: #{zagcnn_forward.3} parent=5 // pred_region
      // Predicated region
      $region41: #{zagcnn_forward.3} parent=39 // pred_check
        %p228 = pneg %p33
      $region42: #{zagcnn_forward.3} parent=39 // pred_check_branch
        %230 = sbr.rel (%p228) target = $region44
      $region43: #{zagcnn_forward.3} parent=39 // pred_region
        %p231 = scmp.lt.s32.totalorder %s13, 1
        %s232 = scalar_select %p231, %s13, 1
        %s233 = smul.addr %s232, 2
        %s234 = smul.addr %s233, 4
        %s235 = scalar_lea.vmem %s0, %s234
      $region44: #{zagcnn_forward.3} parent=39 // pred_fallthru
        _
    $region40: #{zagcnn_forward.3} parent=5 // pred_fallthru
      _
    %p236 = scmp.le.s32.totalorder 1, %s13
    %p237 = scmp.lt.s32.totalorder %s13, 3
    %p238 = pnand %p236, %p237
    %p239 = pneg %p238
    // Predicated region
    $region45: #{zagcnn_forward.3} parent=5 // pred_check
      _
    $region46: #{zagcnn_forward.3} parent=5 // pred_check_branch
      %241 = sbr.rel (%p238) target = $region48
    $region47: #{zagcnn_forward.3} parent=5 // pred_region
      %s242 = ssub.s32 %s13, 1
      %p243 = scmp.lt.s32.totalorder %s18, 1
      %s244 = scalar_select %p243, %s18, 1
      %s245 = smul.addr %s244, 2
      %s246 = smul.addr %s245, 4
      %s247 = scalar_lea.vmem %s0, %s246
      %p248 = pneg %p39
      %p249 = pneg %p36
      %p250 = pneg %p60
      %p251 = pneg %p57
      %p252 = pneg %p81
      %p253 = pneg %p78
      %p254 = pneg %p102
      %p255 = pneg %p99
      %p256 = pneg %p123
      %p257 = pneg %p120
      %p258 = pneg %p144
      %p259 = pneg %p141
      %p260 = pneg %p165
      %p261 = pneg %p162
      %p262 = pneg %p191
      %p263 = pneg %p188
      %p264 = scmp.lt.s32.totalorder %s18, 1
      %s265 = scalar_select %p264, %s18, 1
      %s266 = smul.addr %s265, 2
      %s267 = smul.addr %s266, 4
      %s268 = scalar_lea.vmem %s7, %s267
      %p269 = scmp.lt.s32.totalorder %s18, 1
      %s270 = scalar_select %p269, %s18, 1
      %s271 = smul.addr %s270, 2
      %s272 = smul.addr %s271, 4
      %s273 = scalar_lea.vmem %s0, %s272
      %p274 = scmp.lt.s32.totalorder %s18, 1
      %s275 = scalar_select %p274, %s18, 1
      %s276 = smul.addr %s275, 2
      %s277 = smul.addr %s276, 4
      %s278 = scalar_lea.vmem %s7, %s277
      %v280 = vld [vmem:[%s273] sm:$0xf]
      %v281 = vld [vmem:[%s273 + $0x4] sm:$0xf]
      %v282 = vld [vmem:[%s2] sm:$0xf]
      %v283 = vld [vmem:[%s2 + $0x4] sm:$0xf]
      %v284 = vld [vmem:[%s2 + $0x8] sm:$0xf]
      %v285 = vld [vmem:[%s2 + $0xc] sm:$0xf]
      %v286 = vld [vmem:[%s2 + $0x10] sm:$0xf]
      %v287 = vld [vmem:[%s2 + $0x14] sm:$0xf]
      %v288 = vld [vmem:[%s2 + $0x18] sm:$0xf]
      %v289 = vld [vmem:[%s2 + $0x1c] sm:$0xf]
      %v290 = vld [vmem:[%s2 + $0x20] sm:$0xf]
      %v291 = vld [vmem:[%s2 + $0x24] sm:$0xf]
      %v292 = vld [vmem:[%s2 + $0x28] sm:$0xf]
      %v293 = vld [vmem:[%s2 + $0x2c] sm:$0xf]
      %v294 = vld [vmem:[%s2 + $0x30] sm:$0xf]
      %v295 = vld [vmem:[%s2 + $0x34] sm:$0xf]
      %v296 = vld [vmem:[%s2 + $0x38] sm:$0xf]
      %v297 = vld [vmem:[%s2 + $0x3c] sm:$0xf]
      %v298 = vld [vmem:[%s3] sm:$0x1]
      %v300 = vlaneseq
      %v301 = vshrl.u32 %v300, 7
      %v302 = vsub.s32 0, %v301
      %v303 = vrot.slane %v298, %v302
      %v307 = vunpack.c.l.b16 %v280
      %v308 = vunpack.c.l.b16 %v281
      %v309 = vpack.c.b16 %v308, %v307
      %v327 = vunpack.c.l.b16 %v282
      %v328 = vunpack.c.l.b16 %v283
      %v329 = vunpack.c.l.b16 %v284
      %v330 = vunpack.c.l.b16 %v285
      %v331 = vunpack.c.l.b16 %v286
      %v332 = vunpack.c.l.b16 %v287
      %v333 = vunpack.c.l.b16 %v288
      %v334 = vunpack.c.l.b16 %v289
      %v335 = vunpack.c.l.b16 %v290
      %v336 = vunpack.c.l.b16 %v291
      %v337 = vunpack.c.l.b16 %v292
      %v338 = vunpack.c.l.b16 %v293
      %v339 = vunpack.c.l.b16 %v294
      %v340 = vunpack.c.l.b16 %v295
      %v341 = vunpack.c.l.b16 %v296
      %v342 = vunpack.c.l.b16 %v297
      %v343 = vpack.c.b16 %v328, %v327
      %v344 = vpack.c.b16 %v330, %v329
      %v345 = vpack.c.b16 %v332, %v331
      %v346 = vpack.c.b16 %v334, %v333
      %v347 = vpack.c.b16 %v336, %v335
      %v348 = vpack.c.b16 %v338, %v337
      %v349 = vpack.c.b16 %v340, %v339
      %v350 = vpack.c.b16 %v342, %v341
      %359 = vmatprep.subr.bf16.mxu0 0
      %360 = vmatpush1.bf16.msra.mxu0 %v350
      %361 = vmatprep.subr.bf16.mxu0 0
      %362 = vmatpush1.bf16.msra.mxu0 %v349
      %363 = vmatprep.subr.bf16.mxu0 0
      %364 = vmatpush1.bf16.msra.mxu0 %v348
      %365 = vmatprep.subr.bf16.mxu0 0
      %366 = vmatpush1.bf16.msra.mxu0 %v347
      %367 = vmatprep.subr.bf16.mxu0 0
      %368 = vmatpush1.bf16.msra.mxu0 %v346
      %369 = vmatprep.subr.bf16.mxu0 0
      %370 = vmatpush1.bf16.msra.mxu0 %v345
      %371 = vmatprep.subr.bf16.mxu0 0
      %372 = vmatpush1.bf16.msra.mxu0 %v344
      %373 = vmatprep.subr.bf16.mxu0 0
      %374 = vmatpush1.bf16.msra.mxu0 %v343
      %375 = vmatprep.subr.bf16.mxu0 0
      %376 = vmatpush2.bf16.msra.mxu0 0
      %377 = vmatprep.subr.bf16.mxu0 0
      %378 = vmatpush2.bf16.msra.mxu0 0
      %379 = vmatprep.subr.bf16.mxu0 0
      %380 = vmatpush2.bf16.msra.mxu0 0
      %381 = vmatprep.subr.bf16.mxu0 0
      %382 = vmatpush2.bf16.msra.mxu0 0
      %383 = vmatprep.subr.bf16.mxu0 0
      %384 = vmatpush2.bf16.msra.mxu0 0
      %385 = vmatprep.subr.bf16.mxu0 0
      %386 = vmatpush2.bf16.msra.mxu0 0
      %387 = vmatprep.subr.bf16.mxu0 0
      %388 = vmatpush2.bf16.msra.mxu0 0
      %389 = vmatprep.subr.bf16.mxu0 0
      %390 = vmatpush2.bf16.msra.mxu0 0
      %391 = vmatprep.mubr.bf16.mxu0 0
      %392 = vmatmul.mubr.bf16.gmra.mxu0 %v309
      %v393 = vpop.f32.mrf.mxu0
      %v394 = vadd.f32 %v303, %v393
      %v395 = vpop.f32.mrf.mxu0
      %v396 = vpop.f32.mrf.mxu0
      %v397 = vadd.f32 %v303, %v396
      %v398 = vpop.f32.mrf.mxu0
      %399 = vdwg.mxu0
      %v400 = vld [vmem:[%s1] sm:$0xf]
      %v401 = vld [vmem:[%s1 + $0x4] sm:$0xf]
      %v402 = vld [vmem:[%s4] sm:$0xf]
      %v403 = vld [vmem:[%s4 + $0x4] sm:$0xf]
      %v404 = vld [vmem:[%s4 + $0x8] sm:$0xf]
      %v405 = vld [vmem:[%s4 + $0xc] sm:$0xf]
      %v406 = vld [vmem:[%s4 + $0x10] sm:$0xf]
      %v407 = vld [vmem:[%s4 + $0x14] sm:$0xf]
      %v408 = vld [vmem:[%s4 + $0x18] sm:$0xf]
      %v409 = vld [vmem:[%s4 + $0x1c] sm:$0xf]
      %v410 = vld [vmem:[%s4 + $0x20] sm:$0xf]
      %v411 = vld [vmem:[%s4 + $0x24] sm:$0xf]
      %v412 = vld [vmem:[%s4 + $0x28] sm:$0xf]
      %v413 = vld [vmem:[%s4 + $0x2c] sm:$0xf]
      %v414 = vld [vmem:[%s4 + $0x30] sm:$0xf]
      %v415 = vld [vmem:[%s4 + $0x34] sm:$0xf]
      %v416 = vld [vmem:[%s4 + $0x38] sm:$0xf]
      %v417 = vld [vmem:[%s4 + $0x3c] sm:$0xf]
      %v418 = vld [vmem:[%s5] sm:$0x1]
      %v420 = vlaneseq
      %v421 = vshrl.u32 %v420, 7
      %v422 = vsub.s32 0, %v421
      %v423 = vrot.slane %v418, %v422
      %v427 = vunpack.c.l.b16 %v400
      %v428 = vunpack.c.l.b16 %v401
      %v429 = vpack.c.b16 %v428, %v427
      %v447 = vunpack.c.l.b16 %v402
      %v448 = vunpack.c.l.b16 %v403
      %v449 = vunpack.c.l.b16 %v404
      %v450 = vunpack.c.l.b16 %v405
      %v451 = vunpack.c.l.b16 %v406
      %v452 = vunpack.c.l.b16 %v407
      %v453 = vunpack.c.l.b16 %v408
      %v454 = vunpack.c.l.b16 %v409
      %v455 = vunpack.c.l.b16 %v410
      %v456 = vunpack.c.l.b16 %v411
      %v457 = vunpack.c.l.b16 %v412
      %v458 = vunpack.c.l.b16 %v413
      %v459 = vunpack.c.l.b16 %v414
      %v460 = vunpack.c.l.b16 %v415
      %v461 = vunpack.c.l.b16 %v416
      %v462 = vunpack.c.l.b16 %v417
      %v463 = vpack.c.b16 %v448, %v447
      %v464 = vpack.c.b16 %v450, %v449
      %v465 = vpack.c.b16 %v452, %v451
      %v466 = vpack.c.b16 %v454, %v453
      %v467 = vpack.c.b16 %v456, %v455
      %v468 = vpack.c.b16 %v458, %v457
      %v469 = vpack.c.b16 %v460, %v459
      %v470 = vpack.c.b16 %v462, %v461
      %479 = vmatprep.subr.bf16.mxu0 0
      %480 = vmatpush1.bf16.msra.mxu0 %v470
      %481 = vmatprep.subr.bf16.mxu0 0
      %482 = vmatpush1.bf16.msra.mxu0 %v469
      %483 = vmatprep.subr.bf16.mxu0 0
      %484 = vmatpush1.bf16.msra.mxu0 %v468
      %485 = vmatprep.subr.bf16.mxu0 0
      %486 = vmatpush1.bf16.msra.mxu0 %v467
      %487 = vmatprep.subr.bf16.mxu0 0
      %488 = vmatpush1.bf16.msra.mxu0 %v466
      %489 = vmatprep.subr.bf16.mxu0 0
      %490 = vmatpush1.bf16.msra.mxu0 %v465
      %491 = vmatprep.subr.bf16.mxu0 0
      %492 = vmatpush1.bf16.msra.mxu0 %v464
      %493 = vmatprep.subr.bf16.mxu0 0
      %494 = vmatpush1.bf16.msra.mxu0 %v463
      %495 = vmatprep.subr.bf16.mxu0 0
      %496 = vmatpush2.bf16.msra.mxu0 0
      %497 = vmatprep.subr.bf16.mxu0 0
      %498 = vmatpush2.bf16.msra.mxu0 0
      %499 = vmatprep.subr.bf16.mxu0 0
      %500 = vmatpush2.bf16.msra.mxu0 0
      %501 = vmatprep.subr.bf16.mxu0 0
      %502 = vmatpush2.bf16.msra.mxu0 0
      %503 = vmatprep.subr.bf16.mxu0 0
      %504 = vmatpush2.bf16.msra.mxu0 0
      %505 = vmatprep.subr.bf16.mxu0 0
      %506 = vmatpush2.bf16.msra.mxu0 0
      %507 = vmatprep.subr.bf16.mxu0 0
      %508 = vmatpush2.bf16.msra.mxu0 0
      %509 = vmatprep.subr.bf16.mxu0 0
      %510 = vmatpush2.bf16.msra.mxu0 0
      %511 = vmatprep.mubr.bf16.mxu0 0
      %512 = vmatmul.mubr.bf16.gmra.mxu0 %v429
      %v513 = vpop.f32.mrf.mxu0
      %v514 = vadd.f32 %v423, %v513
      %v515 = vpop.f32.mrf.mxu0
      %v516 = vpop.f32.mrf.mxu0
      %v517 = vadd.f32 %v423, %v516
      %v518 = vpop.f32.mrf.mxu0
      %519 = vdwg.mxu0
      %v520 = vpack.c.bf16 %v397, %v394
      %v521 = vpack.c.bf16 %v517, %v514
      %522 = vmatprep.subr.bf16.mxu0 0
      %523 = vmatpush1.bf16.xpose.msra.mxu0 0
      %524 = vmatprep.subr.bf16.mxu0 0
      %525 = vmatpush1.bf16.xpose.msra.mxu0 0
      %526 = vmatprep.subr.bf16.mxu0 0
      %527 = vmatpush1.bf16.xpose.msra.mxu0 0
      %528 = vmatprep.subr.bf16.mxu0 0
      %529 = vmatpush1.bf16.xpose.msra.mxu0 0
      %530 = vmatprep.subr.bf16.mxu0 0
      %531 = vmatpush1.bf16.xpose.msra.mxu0 0
      %532 = vmatprep.subr.bf16.mxu0 0
      %533 = vmatpush1.bf16.xpose.msra.mxu0 0
      %534 = vmatprep.subr.bf16.mxu0 0
      %535 = vmatpush1.bf16.xpose.msra.mxu0 0
      %536 = vmatprep.subr.bf16.mxu0 0
      %537 = vmatpush1.bf16.xpose.msra.mxu0 %v521
      %538 = vmatprep.subr.bf16.mxu0 0
      %539 = vmatpush2.bf16.xpose.msra.mxu0 0
      %540 = vmatprep.subr.bf16.mxu0 0
      %541 = vmatpush2.bf16.xpose.msra.mxu0 0
      %542 = vmatprep.subr.bf16.mxu0 0
      %543 = vmatpush2.bf16.xpose.msra.mxu0 0
      %544 = vmatprep.subr.bf16.mxu0 0
      %545 = vmatpush2.bf16.xpose.msra.mxu0 0
      %546 = vmatprep.subr.bf16.mxu0 0
      %547 = vmatpush2.bf16.xpose.msra.mxu0 0
      %548 = vmatprep.subr.bf16.mxu0 0
      %549 = vmatpush2.bf16.xpose.msra.mxu0 0
      %550 = vmatprep.subr.bf16.mxu0 0
      %551 = vmatpush2.bf16.xpose.msra.mxu0 0
      %552 = vmatprep.subr.bf16.mxu0 0
      %553 = vmatpush2.bf16.xpose.msra.mxu0 0
      %554 = vmatprep.mubr.bf16.mxu0 0
      %555 = vmatmul.mubr.bf16.gmra.mxu0 %v520
      %v556 = vpop.f32.mrf.mxu0
      %v557 = vadd.f32 0.0, %v556
      %v558 = vpop.f32.mrf.mxu0
      %v559 = vpop.f32.mrf.mxu0
      %v560 = vadd.f32 0.0, %v559
      %v561 = vpop.f32.mrf.mxu0
      %562 = vdwg.mxu0
      %vm563 = vcmask 130048
      %v564 = vsel %vm563, %v557, -inf
      %565 = vmax.xlane.f32.xlu0 %v564
      %v566 = vpop.xlane.xlu0 %565
      %v567 = vsel %vm563, %v560, -inf
      %568 = vmax.xlane.f32.xlu0 %v567
      %v569 = vpop.xlane.xlu0 %568
      %v570 = vsub.f32 %v557, %v566
      %v571 = vsub.f32 %v560, %v569
      %v572 = vmul.f32 %v570, 1.442695
      %v573 = vpow.pop %v572
      %v574 = vmul.f32 %v571, 1.442695
      %v575 = vpow.pop %v574
      %v576 = vsel %vm563, %v573, 0.0
      %577 = vadd.xlane.f32.xlu0 %v576
      %v578 = vpop.xlane.xlu0 %577
      %v579 = vsel %vm563, %v575, 0.0
      %580 = vadd.xlane.f32.xlu0 %v579
      %v581 = vpop.xlane.xlu0 %580
      %v582 = vrcp.pop %v578
      %v583 = vrcp.pop %v581
      %v584 = vmul.f32 %v573, %v582
      %v585 = vmul.f32 %v575, %v583
      %586 = vxpose.xlu0.b32.start [1/16] %v584, 128
      %587 = vxpose.xlu0.b32.cont [2/16] %v585, 128
      %588 = vxpose.xlu0.b32.cont [3/16] 0.0, 128
      %589 = vxpose.xlu0.b32.cont [4/16] 0.0, 128
      %590 = vxpose.xlu0.b32.cont [5/16] 0.0, 128
      %591 = vxpose.xlu0.b32.cont [6/16] 0.0, 128
      %592 = vxpose.xlu0.b32.cont [7/16] 0.0, 128
      %593 = vxpose.xlu0.b32.cont [8/16] 0.0, 128
      %594 = vxpose.xlu0.b32.cont [9/16] 0.0, 128
      %595 = vxpose.xlu0.b32.cont [10/16] 0.0, 128
      %596 = vxpose.xlu0.b32.cont [11/16] 0.0, 128
      %597 = vxpose.xlu0.b32.cont [12/16] 0.0, 128
      %598 = vxpose.xlu0.b32.cont [13/16] 0.0, 128
      %599 = vxpose.xlu0.b32.cont [14/16] 0.0, 128
      %600 = vxpose.xlu0.b32.cont [15/16] 0.0, 128
      %601 = vxpose.xlu0.b32.end [16/16] 0.0, 128
      %v602 = vpop.trf.xlu0
      %v603 = vpop.trf.xlu0
      %v604 = vpop.trf.xlu0
      %v605 = vpop.trf.xlu0
      %v606 = vpop.trf.xlu0
      %v607 = vpop.trf.xlu0
      %v608 = vpop.trf.xlu0
      %v609 = vpop.trf.xlu0
      %v610 = vpop.trf.xlu0
      %v611 = vpop.trf.xlu0
      %v612 = vpop.trf.xlu0
      %v613 = vpop.trf.xlu0
      %v614 = vpop.trf.xlu0
      %v615 = vpop.trf.xlu0
      %v616 = vpop.trf.xlu0
      %v617 = vpop.trf.xlu0
      %v618 = vpack.c.bf16 %v603, %v602
      %v620 = vsel %vm563, %v618, 0
      %622 = vmatprep.subr.bf16.mxu0 0
      %623 = vmatpush1.bf16.msra.mxu0 0
      %624 = vmatprep.subr.bf16.mxu0 0
      %625 = vmatpush1.bf16.msra.mxu0 0
      %626 = vmatprep.subr.bf16.mxu0 0
      %627 = vmatpush1.bf16.msra.mxu0 0
      %628 = vmatprep.subr.bf16.mxu0 0
      %629 = vmatpush1.bf16.msra.mxu0 0
      %630 = vmatprep.subr.bf16.mxu0 0
      %631 = vmatpush1.bf16.msra.mxu0 0
      %632 = vmatprep.subr.bf16.mxu0 0
      %633 = vmatpush1.bf16.msra.mxu0 0
      %634 = vmatprep.subr.bf16.mxu0 0
      %635 = vmatpush1.bf16.msra.mxu0 0
      %636 = vmatprep.subr.bf16.mxu0 0
      %637 = vmatpush1.bf16.msra.mxu0 %v309
      %638 = vmatprep.subr.bf16.mxu0 0
      %639 = vmatpush2.bf16.msra.mxu0 0
      %640 = vmatprep.subr.bf16.mxu0 0
      %641 = vmatpush2.bf16.msra.mxu0 0
      %642 = vmatprep.subr.bf16.mxu0 0
      %643 = vmatpush2.bf16.msra.mxu0 0
      %644 = vmatprep.subr.bf16.mxu0 0
      %645 = vmatpush2.bf16.msra.mxu0 0
      %646 = vmatprep.subr.bf16.mxu0 0
      %647 = vmatpush2.bf16.msra.mxu0 0
      %648 = vmatprep.subr.bf16.mxu0 0
      %649 = vmatpush2.bf16.msra.mxu0 0
      %650 = vmatprep.subr.bf16.mxu0 0
      %651 = vmatpush2.bf16.msra.mxu0 0
      %652 = vmatprep.subr.bf16.mxu0 0
      %653 = vmatpush2.bf16.msra.mxu0 0
      %654 = vmatprep.mubr.bf16.mxu0 0
      %655 = vmatmul.mubr.bf16.gmra.mxu0 %v620
      %v656 = vpop.f32.mrf.mxu0
      %v657 = vadd.f32 0.0, %v656
      %v658 = vpop.f32.mrf.mxu0
      %v659 = vpop.f32.mrf.mxu0
      %v660 = vadd.f32 0.0, %v659
      %v661 = vpop.f32.mrf.mxu0
      %662 = vdwg.mxu0
      %v663 = vld [vmem:[%s6] sm:$0xff]
      %v664 = vld [vmem:[%s6 + $0x8] sm:$0xff]
      %v665 = vmax.f32 %v657, 0.0
      %v666 = vmax.f32 %v660, 0.0
      %v667 = vmul.f32 %v665, %v663
      %v668 = vmul.f32 %v666, %v664
      %v669 = vpack.c.bf16 %v668, %v667
      %v671 = vunpack.c.l.b16 %v669
      %v672 = vunpack.c.h.b16 %v669
      %v673 = vpack.c.b16 %v671, %v671
      %v674 = vpack.c.b16 %v672, %v672
      %677 = vst [vmem:[%s278] sm:$0xf] %v673
      %678 = vst [vmem:[%s278 + $0x4] sm:$0xf] %v674
      %p679 = scmp.lt.s32.totalorder %s18, 1
      %s680 = scalar_select %p679, %s18, 1
      %s681 = smul.addr %s680, 2
      %s682 = smul.addr %s681, 4
      %s683 = scalar_lea.vmem %s7, %s682
      // Predicated region
      $region49: #{zagcnn_forward.3} parent=47 // pred_check
        %p684 = pneg %p188
      $region50: #{zagcnn_forward.3} parent=47 // pred_check_branch
        %686 = sbr.rel (%p684) target = $region52
      $region51: #{zagcnn_forward.3} parent=47 // pred_region
        _
      $region52: #{zagcnn_forward.3} parent=47 // pred_fallthru
        _
    $region48: #{zagcnn_forward.3} parent=5 // pred_fallthru
      _
    %p687 = scmp.le.s32.totalorder 2, %s13
    // Predicated region
    $region53: #{zagcnn_forward.3} parent=5 // pred_check
      %p688 = pneg %p687
    $region54: #{zagcnn_forward.3} parent=5 // pred_check_branch
      %690 = sbr.rel (%p688) target = $region56
    $region55: #{zagcnn_forward.3} parent=5 // pred_region
      %s691 = ssub.s32 %s13, 2
      // Predicated region
      $region57: #{zagcnn_forward.3} parent=55 // pred_check
        %p692 = pneg %p194
      $region58: #{zagcnn_forward.3} parent=55 // pred_check_branch
        %694 = sbr.rel (%p692) target = $region60
      $region59: #{zagcnn_forward.3} parent=55 // pred_region
        %p695 = scmp.lt.s32.totalorder %s19, 1
        %s696 = scalar_select %p695, %s19, 1
        %s697 = smul.addr %s696, 2
        %s698 = smul.addr %s697, 4
        %s699 = scalar_lea.vmem %s7, %s698
      $region60: #{zagcnn_forward.3} parent=55 // pred_fallthru
        _
    $region56: #{zagcnn_forward.3} parent=5 // pred_fallthru
      _
  $region6: #{zagcnn_forward.3} parent=0 // loop_footer
    %s17 = sadd.s32 1, %s13
  $region7: #{zagcnn_forward.3} parent=0 // loop_footer_branch
    %12 = sbr.rel target = $region3
  $region8: #{zagcnn_forward.3} parent=0 // loop_exit
    _

// kernel: zagcnn_forward.2
$region0: #{zagcnn_forward.2}
  #allocation0 [shape = 'u32[]', space=smem, size = 0x4, offset = 0x4, fixed_abs, tag = 'smem constant byte address 0x4 - core index']
  #allocation1 [shape = 'u32[144,128]{1,0:T(1,128)}', space=vmem, size = 0x12000, scoped, tag = 'internal scratch']
  %s0 = inlined_call_operand.vmem [shape: f32[16,128], index: 0, kind: input, shape index: {}]
  %s1 = inlined_call_operand.vmem [shape: f32[16,16], index: 1, kind: input, shape index: {}]
  %s2 = inlined_call_operand.hbm [shape: f32[3,128,128], index: 2, kind: input, shape index: {}]
  %s3 = inlined_call_operand.vmem [shape: f32[3,1,128], index: 3, kind: input, shape index: {}]
  %s4 = inlined_call_operand.hbm [shape: f32[128,128], index: 4, kind: input, shape index: {}]
  %s5 = inlined_call_operand.hbm [shape: f32[128,128], index: 5, kind: input, shape index: {}]
  %s6 = inlined_call_operand.vmem [shape: f32[1,128], index: 6, kind: input, shape index: {}]
  %s7 = inlined_call_operand.vmem [shape: f32[16,128], index: 7, kind: output, shape index: {}]
  %s8 = sld [smem:[#allocation0]]
  $region50: #{zagcnn_forward.2} parent=0
    _
  %s10 = ssub.s32 1, %s8
  %s11 = scalar_select 0, %s10, %s8
  $region1: #{zagcnn_forward.2} parent=0
    #allocation2 [shape = 'u8[196608]{0}', space=vmem, size = 0x30000, scoped, tag = 'input window, operand 2, single buffered']
    #allocation3 [shape = 's32[1]{0}', space=sflag, size = 0x4, scoped, tag = 'scoped memory for zagcnn_forward.2']
    #allocation4 [shape = 'u8[65536]{0}', space=vmem, size = 0x10000, scoped, tag = 'input window, operand 4, single buffered']
    #allocation5 [shape = 's32[1]{0}', space=sflag, size = 0x4, scoped, tag = 'scoped memory for zagcnn_forward.2']
    #allocation6 [shape = 'u8[65536]{0}', space=vmem, size = 0x10000, scoped, tag = 'input window, operand 5, single buffered']
    %12 = vsyncpa [#allocation3], 0
    %13 = vsyncpa [#allocation5], 0
    // Predicated region
    $region2: #{zagcnn_forward.2} parent=1 // pred_check
      _
    $region3: #{zagcnn_forward.2} parent=1 // pred_check_branch
      %15 = sbr.rel (0) target = $region5
    $region4: #{zagcnn_forward.2} parent=1 // pred_region
      _
    $region5: #{zagcnn_forward.2} parent=1 // pred_fallthru
      _
    // Predicated region
    $region6: #{zagcnn_forward.2} parent=1 // pred_check
      _
    $region7: #{zagcnn_forward.2} parent=1 // pred_check_branch
      %17 = sbr.rel (0) target = $region9
    $region8: #{zagcnn_forward.2} parent=1 // pred_region
      _
    $region9: #{zagcnn_forward.2} parent=1 // pred_fallthru
      _
    // Predicated region
    $region10: #{zagcnn_forward.2} parent=1 // pred_check
      _
    $region11: #{zagcnn_forward.2} parent=1 // pred_check_branch
      %19 = sbr.rel (0) target = $region13
    $region12: #{zagcnn_forward.2} parent=1 // pred_region
      %s21 = ssub.s32 6144, 6144
      %22 = vsyncadd [#allocation3], %s21
      %s23 = sshll.u32 [#allocation2], 4
      %s24 = int_to_ptr.vmem [resolvable:$true] %s23
      %29 = dma.hbm_to_vmem [thread:$0]  %s2, 6144, %s24, [#allocation3], 128, 128, 8
    $region13: #{zagcnn_forward.2} parent=1 // pred_fallthru
      _
    // Predicated region
    $region14: #{zagcnn_forward.2} parent=1 // pred_check
      _
    $region15: #{zagcnn_forward.2} parent=1 // pred_check_branch
      %31 = sbr.rel (0) target = $region17
    $region16: #{zagcnn_forward.2} parent=1 // pred_region
      _
    $region17: #{zagcnn_forward.2} parent=1 // pred_fallthru
      _
    // Predicated region
    $region18: #{zagcnn_forward.2} parent=1 // pred_check
      _
    $region19: #{zagcnn_forward.2} parent=1 // pred_check_branch
      %33 = sbr.rel (0) target = $region21
    $region20: #{zagcnn_forward.2} parent=1 // pred_region
      %s35 = ssub.s32 2048, 2048
      %36 = vsyncadd [#allocation5], %s35
      %s37 = sshll.u32 [#allocation4], 4
      %s38 = int_to_ptr.vmem [resolvable:$true] %s37
      %43 = dma.hbm_to_vmem [thread:$0]  %s4, 2048, %s38, [#allocation5], 128, 128, 8
    $region21: #{zagcnn_forward.2} parent=1 // pred_fallthru
      _
    // Predicated region
    $region22: #{zagcnn_forward.2} parent=1 // pred_check
      _
    $region23: #{zagcnn_forward.2} parent=1 // pred_check_branch
      %45 = sbr.rel (0) target = $region25
    $region24: #{zagcnn_forward.2} parent=1 // pred_region
      %s47 = ssub.s32 2048, 2048
      %48 = vsyncadd [#allocation5], %s47
      %s49 = sshll.u32 [#allocation6], 4
      %s50 = int_to_ptr.vmem [resolvable:$true] %s49
      %55 = dma.hbm_to_vmem [thread:$0]  %s5, 2048, %s50, [#allocation5], 128, 128, 8
    $region25: #{zagcnn_forward.2} parent=1 // pred_fallthru
      _
    // Predicated region
    $region26: #{zagcnn_forward.2} parent=1 // pred_check
      _
    $region27: #{zagcnn_forward.2} parent=1 // pred_check_branch
      %57 = sbr.rel (0) target = $region29
    $region28: #{zagcnn_forward.2} parent=1 // pred_region
      _
    $region29: #{zagcnn_forward.2} parent=1 // pred_fallthru
      _
    // Predicated region
    $region30: #{zagcnn_forward.2} parent=1 // pred_check
      _
    $region31: #{zagcnn_forward.2} parent=1 // pred_check_branch
      %59 = sbr.rel (0) target = $region33
    $region32: #{zagcnn_forward.2} parent=1 // pred_region
      %60 = dma.done [#allocation3], 6144
    $region33: #{zagcnn_forward.2} parent=1 // pred_fallthru
      _
    // Predicated region
    $region34: #{zagcnn_forward.2} parent=1 // pred_check
      _
    $region35: #{zagcnn_forward.2} parent=1 // pred_check_branch
      %62 = sbr.rel (0) target = $region37
    $region36: #{zagcnn_forward.2} parent=1 // pred_region
      %63 = dma.done [#allocation5], 2048
    $region37: #{zagcnn_forward.2} parent=1 // pred_fallthru
      _
    // Predicated region
    $region38: #{zagcnn_forward.2} parent=1 // pred_check
      _
    $region39: #{zagcnn_forward.2} parent=1 // pred_check_branch
      %65 = sbr.rel (0) target = $region41
    $region40: #{zagcnn_forward.2} parent=1 // pred_region
      %66 = dma.done [#allocation5], 2048
    $region41: #{zagcnn_forward.2} parent=1 // pred_fallthru
      _
    %v67 = vld [vmem:[%s0] sm:$0xff]
    %v68 = vld [vmem:[%s0 + $0x8] sm:$0xff]
    %v69 = vld [vmem:[%s1] sm:$0xff]
    %v70 = vld [vmem:[%s1 + $0x8] sm:$0xff]
    %vm71 = vcmask 130048
    %v73 = vsel %vm71, %v69, 0
    %v76 = vsel %vm71, %v70, 0
    %78 = vmatprep.subr.mxu0 0.0
    %79 = vmatpush1.msra.mxu0 0.0
    %80 = vmatprep.subr.mxu0 0.0
    %81 = vmatpush1.msra.mxu0 0.0
    %82 = vmatprep.subr.mxu0 0.0
    %83 = vmatpush1.msra.mxu0 0.0
    %84 = vmatprep.subr.mxu0 0.0
    %85 = vmatpush1.msra.mxu0 0.0
    %86 = vmatprep.subr.mxu0 0.0
    %87 = vmatpush1.msra.mxu0 0.0
    %88 = vmatprep.subr.mxu0 0.0
    %89 = vmatpush1.msra.mxu0 0.0
    %90 = vmatprep.subr.mxu0 0.0
    %91 = vmatpush1.msra.mxu0 0.0
    %92 = vmatprep.subr.mxu0 0.0
    %93 = vmatpush1.msra.mxu0 0.0
    %94 = vmatprep.subr.mxu0 0.0
    %95 = vmatpush1.msra.mxu0 0.0
    %96 = vmatprep.subr.mxu0 0.0
    %97 = vmatpush1.msra.mxu0 0.0
    %98 = vmatprep.subr.mxu0 0.0
    %99 = vmatpush1.msra.mxu0 0.0
    %100 = vmatprep.subr.mxu0 0.0
    %101 = vmatpush1.msra.mxu0 0.0
    %102 = vmatprep.subr.mxu0 0.0
    %103 = vmatpush1.msra.mxu0 0.0
    %104 = vmatprep.subr.mxu0 0.0
    %105 = vmatpush1.msra.mxu0 0.0
    %106 = vmatprep.subr.mxu0 0.0
    %107 = vmatpush1.msra.mxu0 %v68
    %108 = vmatprep.subr.mxu0 0.0
    %109 = vmatpush1.msra.mxu0 %v67
    %110 = vmatprep.subr.mxu0 0.0
    %111 = vmatpush2.msra.mxu0 0.0
    %112 = vmatprep.subr.mxu0 0.0
    %113 = vmatpush2.msra.mxu0 0.0
    %114 = vmatprep.subr.mxu0 0.0
    %115 = vmatpush2.msra.mxu0 0.0
    %116 = vmatprep.subr.mxu0 0.0
    %117 = vmatpush2.msra.mxu0 0.0
    %118 = vmatprep.subr.mxu0 0.0
    %119 = vmatpush2.msra.mxu0 0.0
    %120 = vmatprep.subr.mxu0 0.0
    %121 = vmatpush2.msra.mxu0 0.0
    %122 = vmatprep.subr.mxu0 0.0
    %123 = vmatpush2.msra.mxu0 0.0
    %124 = vmatprep.subr.mxu0 0.0
    %125 = vmatpush2.msra.mxu0 0.0
    %126 = vmatprep.subr.mxu0 0.0
    %127 = vmatpush2.msra.mxu0 0.0
    %128 = vmatprep.subr.mxu0 0.0
    %129 = vmatpush2.msra.mxu0 0.0
    %130 = vmatprep.subr.mxu0 0.0
    %131 = vmatpush2.msra.mxu0 0.0
    %132 = vmatprep.subr.mxu0 0.0
    %133 = vmatpush2.msra.mxu0 0.0
    %134 = vmatprep.subr.mxu0 0.0
    %135 = vmatpush2.msra.mxu0 0.0
    %136 = vmatprep.subr.mxu0 0.0
    %137 = vmatpush2.msra.mxu0 0.0
    %138 = vmatprep.subr.mxu0 0.0
    %139 = vmatpush2.msra.mxu0 0.0
    %140 = vmatprep.subr.mxu0 0.0
    %141 = vmatpush2.msra.mxu0 0.0
    %142 = vmatprep.mubr.f32.mxu0 0.0
    %143 = vmatmul.mubr.f32.gmra.mxu0 %v73
    %v144 = vpop.f32.mrf.mxu0
    %v145 = vadd.f32 0.0, %v144
    %v146 = vpop.f32.mrf.mxu0
    %147 = vmatprep.mubr.f32.mxu0 0.0
    %148 = vmatmul.mubr.f32.gmra.mxu0 %v76
    %v149 = vpop.f32.mrf.mxu0
    %v150 = vadd.f32 0.0, %v149
    %v151 = vpop.f32.mrf.mxu0
    %152 = vdwg.mxu0
    %v153 = vld [vmem:[#allocation2] sm:$0xff]
    %v154 = vld [vmem:[#allocation2 + $0x8] sm:$0xff]
    %v155 = vld [vmem:[#allocation2 + $0x10] sm:$0xff]
    %v156 = vld [vmem:[#allocation2 + $0x18] sm:$0xff]
    %v157 = vld [vmem:[#allocation2 + $0x20] sm:$0xff]
    %v158 = vld [vmem:[#allocation2 + $0x28] sm:$0xff]
    %v159 = vld [vmem:[#allocation2 + $0x30] sm:$0xff]
    %v160 = vld [vmem:[#allocation2 + $0x38] sm:$0xff]
    %v161 = vld [vmem:[#allocation2 + $0x40] sm:$0xff]
    %v162 = vld [vmem:[#allocation2 + $0x48] sm:$0xff]
    %v163 = vld [vmem:[#allocation2 + $0x50] sm:$0xff]
    %v164 = vld [vmem:[#allocation2 + $0x58] sm:$0xff]
    %v165 = vld [vmem:[#allocation2 + $0x60] sm:$0xff]
    %v166 = vld [vmem:[#allocation2 + $0x68] sm:$0xff]
    %v167 = vld [vmem:[#allocation2 + $0x70] sm:$0xff]
    %v168 = vld [vmem:[#allocation2 + $0x78] sm:$0xff]
    %v169 = vld [vmem:[%s3] sm:$0x1]
    %v171 = vlaneseq
    %v172 = vshrl.u32 %v171, 7
    %v173 = vsub.s32 0, %v172
    %v174 = vrot.slane %v169, %v173
    %176 = vmatprep.subr.mxu0 0.0
    %177 = vmatpush1.msra.mxu0 %v168
    %178 = vmatprep.subr.mxu0 0.0
    %179 = vmatpush1.msra.mxu0 %v167
    %180 = vmatprep.subr.mxu0 0.0
    %181 = vmatpush1.msra.mxu0 %v166
    %182 = vmatprep.subr.mxu0 0.0
    %183 = vmatpush1.msra.mxu0 %v165
    %184 = vmatprep.subr.mxu0 0.0
    %185 = vmatpush1.msra.mxu0 %v164
    %186 = vmatprep.subr.mxu0 0.0
    %187 = vmatpush1.msra.mxu0 %v163
    %188 = vmatprep.subr.mxu0 0.0
    %189 = vmatpush1.msra.mxu0 %v162
    %190 = vmatprep.subr.mxu0 0.0
    %191 = vmatpush1.msra.mxu0 %v161
    %192 = vmatprep.subr.mxu0 0.0
    %193 = vmatpush1.msra.mxu0 %v160
    %194 = vmatprep.subr.mxu0 0.0
    %195 = vmatpush1.msra.mxu0 %v159
    %196 = vmatprep.subr.mxu0 0.0
    %197 = vmatpush1.msra.mxu0 %v158
    %198 = vmatprep.subr.mxu0 0.0
    %199 = vmatpush1.msra.mxu0 %v157
    %200 = vmatprep.subr.mxu0 0.0
    %201 = vmatpush1.msra.mxu0 %v156
    %202 = vmatprep.subr.mxu0 0.0
    %203 = vmatpush1.msra.mxu0 %v155
    %204 = vmatprep.subr.mxu0 0.0
    %205 = vmatpush1.msra.mxu0 %v154
    %206 = vmatprep.subr.mxu0 0.0
    %207 = vmatpush1.msra.mxu0 %v153
    %208 = vmatprep.subr.mxu0 0.0
    %209 = vmatpush2.msra.mxu0 0.0
    %210 = vmatprep.subr.mxu0 0.0
    %211 = vmatpush2.msra.mxu0 0.0
    %212 = vmatprep.subr.mxu0 0.0
    %213 = vmatpush2.msra.mxu0 0.0
    %214 = vmatprep.subr.mxu0 0.0
    %215 = vmatpush2.msra.mxu0 0.0
    %216 = vmatprep.subr.mxu0 0.0
    %217 = vmatpush2.msra.mxu0 0.0
    %218 = vmatprep.subr.mxu0 0.0
    %219 = vmatpush2.msra.mxu0 0.0
    %220 = vmatprep.subr.mxu0 0.0
    %221 = vmatpush2.msra.mxu0 0.0
    %222 = vmatprep.subr.mxu0 0.0
    %223 = vmatpush2.msra.mxu0 0.0
    %224 = vmatprep.subr.mxu0 0.0
    %225 = vmatpush2.msra.mxu0 0.0
    %226 = vmatprep.subr.mxu0 0.0
    %227 = vmatpush2.msra.mxu0 0.0
    %228 = vmatprep.subr.mxu0 0.0
    %229 = vmatpush2.msra.mxu0 0.0
    %230 = vmatprep.subr.mxu0 0.0
    %231 = vmatpush2.msra.mxu0 0.0
    %232 = vmatprep.subr.mxu0 0.0
    %233 = vmatpush2.msra.mxu0 0.0
    %234 = vmatprep.subr.mxu0 0.0
    %235 = vmatpush2.msra.mxu0 0.0
    %236 = vmatprep.subr.mxu0 0.0
    %237 = vmatpush2.msra.mxu0 0.0
    %238 = vmatprep.subr.mxu0 0.0
    %239 = vmatpush2.msra.mxu0 0.0
    %240 = vmatprep.mubr.f32.mxu0 0.0
    %241 = vmatmul.mubr.f32.gmra.mxu0 %v145
    %v242 = vpop.f32.mrf.mxu0
    %v243 = vadd.f32 %v174, %v242
    %v244 = vpop.f32.mrf.mxu0
    %245 = vmatprep.mubr.f32.mxu0 0.0
    %246 = vmatmul.mubr.f32.gmra.mxu0 %v150
    %v247 = vpop.f32.mrf.mxu0
    %v248 = vadd.f32 %v174, %v247
    %v249 = vpop.f32.mrf.mxu0
    %250 = vdwg.mxu0
    %vm251 = vcmp.gt.f32.partialorder %v243, 0.0
    %vm252 = vcmp.gt.f32.partialorder %v248, 0.0
    %v253 = vmul.f32 %v243, 0.01
    %v254 = vmul.f32 %v248, 0.01
    %v255 = vsel %vm251, %v243, %v253
    %v256 = vsel %vm252, %v248, %v254
    %257 = vmatprep.subr.mxu0 0.0
    %258 = vmatpush1.msra.mxu0 0.0
    %259 = vmatprep.subr.mxu0 0.0
    %260 = vmatpush1.msra.mxu0 0.0
    %261 = vmatprep.subr.mxu0 0.0
    %262 = vmatpush1.msra.mxu0 0.0
    %263 = vmatprep.subr.mxu0 0.0
    %264 = vmatpush1.msra.mxu0 0.0
    %265 = vmatprep.subr.mxu0 0.0
    %266 = vmatpush1.msra.mxu0 0.0
    %267 = vmatprep.subr.mxu0 0.0
    %268 = vmatpush1.msra.mxu0 0.0
    %269 = vmatprep.subr.mxu0 0.0
    %270 = vmatpush1.msra.mxu0 0.0
    %271 = vmatprep.subr.mxu0 0.0
    %272 = vmatpush1.msra.mxu0 0.0
    %273 = vmatprep.subr.mxu0 0.0
    %274 = vmatpush1.msra.mxu0 0.0
    %275 = vmatprep.subr.mxu0 0.0
    %276 = vmatpush1.msra.mxu0 0.0
    %277 = vmatprep.subr.mxu0 0.0
    %278 = vmatpush1.msra.mxu0 0.0
    %279 = vmatprep.subr.mxu0 0.0
    %280 = vmatpush1.msra.mxu0 0.0
    %281 = vmatprep.subr.mxu0 0.0
    %282 = vmatpush1.msra.mxu0 0.0
    %283 = vmatprep.subr.mxu0 0.0
    %284 = vmatpush1.msra.mxu0 0.0
    %285 = vmatprep.subr.mxu0 0.0
    %286 = vmatpush1.msra.mxu0 %v256
    %287 = vmatprep.subr.mxu0 0.0
    %288 = vmatpush1.msra.mxu0 %v255
    %289 = vmatprep.subr.mxu0 0.0
    %290 = vmatpush2.msra.mxu0 0.0
    %291 = vmatprep.subr.mxu0 0.0
    %292 = vmatpush2.msra.mxu0 0.0
    %293 = vmatprep.subr.mxu0 0.0
    %294 = vmatpush2.msra.mxu0 0.0
    %295 = vmatprep.subr.mxu0 0.0
    %296 = vmatpush2.msra.mxu0 0.0
    %297 = vmatprep.subr.mxu0 0.0
    %298 = vmatpush2.msra.mxu0 0.0
    %299 = vmatprep.subr.mxu0 0.0
    %300 = vmatpush2.msra.mxu0 0.0
    %301 = vmatprep.subr.mxu0 0.0
    %302 = vmatpush2.msra.mxu0 0.0
    %303 = vmatprep.subr.mxu0 0.0
    %304 = vmatpush2.msra.mxu0 0.0
    %305 = vmatprep.subr.mxu0 0.0
    %306 = vmatpush2.msra.mxu0 0.0
    %307 = vmatprep.subr.mxu0 0.0
    %308 = vmatpush2.msra.mxu0 0.0
    %309 = vmatprep.subr.mxu0 0.0
    %310 = vmatpush2.msra.mxu0 0.0
    %311 = vmatprep.subr.mxu0 0.0
    %312 = vmatpush2.msra.mxu0 0.0
    %313 = vmatprep.subr.mxu0 0.0
    %314 = vmatpush2.msra.mxu0 0.0
    %315 = vmatprep.subr.mxu0 0.0
    %316 = vmatpush2.msra.mxu0 0.0
    %317 = vmatprep.subr.mxu0 0.0
    %318 = vmatpush2.msra.mxu0 0.0
    %319 = vmatprep.subr.mxu0 0.0
    %320 = vmatpush2.msra.mxu0 0.0
    %321 = vmatprep.mubr.f32.mxu0 0.0
    %322 = vmatmul.mubr.f32.gmra.mxu0 %v73
    %v323 = vpop.f32.mrf.mxu0
    %v324 = vadd.f32 0.0, %v323
    %v325 = vpop.f32.mrf.mxu0
    %326 = vmatprep.mubr.f32.mxu0 0.0
    %327 = vmatmul.mubr.f32.gmra.mxu0 %v76
    %v328 = vpop.f32.mrf.mxu0
    %v329 = vadd.f32 0.0, %v328
    %v330 = vpop.f32.mrf.mxu0
    %331 = vdwg.mxu0
    %s332 = scalar_lea.vmem [#allocation2], 128
    %v333 = vld [vmem:[%s332] sm:$0xff]
    %v334 = vld [vmem:[%s332 + $0x8] sm:$0xff]
    %v335 = vld [vmem:[%s332 + $0x10] sm:$0xff]
    %v336 = vld [vmem:[%s332 + $0x18] sm:$0xff]
    %v337 = vld [vmem:[%s332 + $0x20] sm:$0xff]
    %v338 = vld [vmem:[%s332 + $0x28] sm:$0xff]
    %v339 = vld [vmem:[%s332 + $0x30] sm:$0xff]
    %v340 = vld [vmem:[%s332 + $0x38] sm:$0xff]
    %v341 = vld [vmem:[%s332 + $0x40] sm:$0xff]
    %v342 = vld [vmem:[%s332 + $0x48] sm:$0xff]
    %v343 = vld [vmem:[%s332 + $0x50] sm:$0xff]
    %v344 = vld [vmem:[%s332 + $0x58] sm:$0xff]
    %v345 = vld [vmem:[%s332 + $0x60] sm:$0xff]
    %v346 = vld [vmem:[%s332 + $0x68] sm:$0xff]
    %v347 = vld [vmem:[%s332 + $0x70] sm:$0xff]
    %v348 = vld [vmem:[%s332 + $0x78] sm:$0xff]
    %s349 = scalar_lea.vmem %s3, 1
    %v350 = vld [vmem:[%s349] sm:$0x1]
    %v352 = vlaneseq
    %v353 = vshrl.u32 %v352, 7
    %v354 = vsub.s32 0, %v353
    %v355 = vrot.slane %v350, %v354
    %357 = vmatprep.subr.mxu0 0.0
    %358 = vmatpush1.msra.mxu0 %v348
    %359 = vmatprep.subr.mxu0 0.0
    %360 = vmatpush1.msra.mxu0 %v347
    %361 = vmatprep.subr.mxu0 0.0
    %362 = vmatpush1.msra.mxu0 %v346
    %363 = vmatprep.subr.mxu0 0.0
    %364 = vmatpush1.msra.mxu0 %v345
    %365 = vmatprep.subr.mxu0 0.0
    %366 = vmatpush1.msra.mxu0 %v344
    %367 = vmatprep.subr.mxu0 0.0
    %368 = vmatpush1.msra.mxu0 %v343
    %369 = vmatprep.subr.mxu0 0.0
    %370 = vmatpush1.msra.mxu0 %v342
    %371 = vmatprep.subr.mxu0 0.0
    %372 = vmatpush1.msra.mxu0 %v341
    %373 = vmatprep.subr.mxu0 0.0
    %374 = vmatpush1.msra.mxu0 %v340
    %375 = vmatprep.subr.mxu0 0.0
    %376 = vmatpush1.msra.mxu0 %v339
    %377 = vmatprep.subr.mxu0 0.0
    %378 = vmatpush1.msra.mxu0 %v338
    %379 = vmatprep.subr.mxu0 0.0
    %380 = vmatpush1.msra.mxu0 %v337
    %381 = vmatprep.subr.mxu0 0.0
    %382 = vmatpush1.msra.mxu0 %v336
    %383 = vmatprep.subr.mxu0 0.0
    %384 = vmatpush1.msra.mxu0 %v335
    %385 = vmatprep.subr.mxu0 0.0
    %386 = vmatpush1.msra.mxu0 %v334
    %387 = vmatprep.subr.mxu0 0.0
    %388 = vmatpush1.msra.mxu0 %v333
    %389 = vmatprep.subr.mxu0 0.0
    %390 = vmatpush2.msra.mxu0 0.0
    %391 = vmatprep.subr.mxu0 0.0
    %392 = vmatpush2.msra.mxu0 0.0
    %393 = vmatprep.subr.mxu0 0.0
    %394 = vmatpush2.msra.mxu0 0.0
    %395 = vmatprep.subr.mxu0 0.0
    %396 = vmatpush2.msra.mxu0 0.0
    %397 = vmatprep.subr.mxu0 0.0
    %398 = vmatpush2.msra.mxu0 0.0
    %399 = vmatprep.subr.mxu0 0.0
    %400 = vmatpush2.msra.mxu0 0.0
    %401 = vmatprep.subr.mxu0 0.0
    %402 = vmatpush2.msra.mxu0 0.0
    %403 = vmatprep.subr.mxu0 0.0
    %404 = vmatpush2.msra.mxu0 0.0
    %405 = vmatprep.subr.mxu0 0.0
    %406 = vmatpush2.msra.mxu0 0.0
    %407 = vmatprep.subr.mxu0 0.0
    %408 = vmatpush2.msra.mxu0 0.0
    %409 = vmatprep.subr.mxu0 0.0
    %410 = vmatpush2.msra.mxu0 0.0
    %411 = vmatprep.subr.mxu0 0.0
    %412 = vmatpush2.msra.mxu0 0.0
    %413 = vmatprep.subr.mxu0 0.0
    %414 = vmatpush2.msra.mxu0 0.0
    %415 = vmatprep.subr.mxu0 0.0
    %416 = vmatpush2.msra.mxu0 0.0
    %417 = vmatprep.subr.mxu0 0.0
    %418 = vmatpush2.msra.mxu0 0.0
    %419 = vmatprep.subr.mxu0 0.0
    %420 = vmatpush2.msra.mxu0 0.0
    %421 = vmatprep.mubr.f32.mxu0 0.0
    %422 = vmatmul.mubr.f32.gmra.mxu0 %v324
    %v423 = vpop.f32.mrf.mxu0
    %v424 = vadd.f32 %v355, %v423
    %v425 = vpop.f32.mrf.mxu0
    %426 = vmatprep.mubr.f32.mxu0 0.0
    %427 = vmatmul.mubr.f32.gmra.mxu0 %v329
    %v428 = vpop.f32.mrf.mxu0
    %v429 = vadd.f32 %v355, %v428
    %v430 = vpop.f32.mrf.mxu0
    %431 = vdwg.mxu0
    %vm432 = vcmp.gt.f32.partialorder %v424, 0.0
    %vm433 = vcmp.gt.f32.partialorder %v429, 0.0
    %v434 = vmul.f32 %v424, 0.01
    %v435 = vmul.f32 %v429, 0.01
    %v436 = vsel %vm432, %v424, %v434
    %v437 = vsel %vm433, %v429, %v435
    %438 = vmatprep.subr.mxu0 0.0
    %439 = vmatpush1.msra.mxu0 0.0
    %440 = vmatprep.subr.mxu0 0.0
    %441 = vmatpush1.msra.mxu0 0.0
    %442 = vmatprep.subr.mxu0 0.0
    %443 = vmatpush1.msra.mxu0 0.0
    %444 = vmatprep.subr.mxu0 0.0
    %445 = vmatpush1.msra.mxu0 0.0
    %446 = vmatprep.subr.mxu0 0.0
    %447 = vmatpush1.msra.mxu0 0.0
    %448 = vmatprep.subr.mxu0 0.0
    %449 = vmatpush1.msra.mxu0 0.0
    %450 = vmatprep.subr.mxu0 0.0
    %451 = vmatpush1.msra.mxu0 0.0
    %452 = vmatprep.subr.mxu0 0.0
    %453 = vmatpush1.msra.mxu0 0.0
    %454 = vmatprep.subr.mxu0 0.0
    %455 = vmatpush1.msra.mxu0 0.0
    %456 = vmatprep.subr.mxu0 0.0
    %457 = vmatpush1.msra.mxu0 0.0
    %458 = vmatprep.subr.mxu0 0.0
    %459 = vmatpush1.msra.mxu0 0.0
    %460 = vmatprep.subr.mxu0 0.0
    %461 = vmatpush1.msra.mxu0 0.0
    %462 = vmatprep.subr.mxu0 0.0
    %463 = vmatpush1.msra.mxu0 0.0
    %464 = vmatprep.subr.mxu0 0.0
    %465 = vmatpush1.msra.mxu0 0.0
    %466 = vmatprep.subr.mxu0 0.0
    %467 = vmatpush1.msra.mxu0 %v437
    %468 = vmatprep.subr.mxu0 0.0
    %469 = vmatpush1.msra.mxu0 %v436
    %470 = vmatprep.subr.mxu0 0.0
    %471 = vmatpush2.msra.mxu0 0.0
    %472 = vmatprep.subr.mxu0 0.0
    %473 = vmatpush2.msra.mxu0 0.0
    %474 = vmatprep.subr.mxu0 0.0
    %475 = vmatpush2.msra.mxu0 0.0
    %476 = vmatprep.subr.mxu0 0.0
    %477 = vmatpush2.msra.mxu0 0.0
    %478 = vmatprep.subr.mxu0 0.0
    %479 = vmatpush2.msra.mxu0 0.0
    %480 = vmatprep.subr.mxu0 0.0
    %481 = vmatpush2.msra.mxu0 0.0
    %482 = vmatprep.subr.mxu0 0.0
    %483 = vmatpush2.msra.mxu0 0.0
    %484 = vmatprep.subr.mxu0 0.0
    %485 = vmatpush2.msra.mxu0 0.0
    %486 = vmatprep.subr.mxu0 0.0
    %487 = vmatpush2.msra.mxu0 0.0
    %488 = vmatprep.subr.mxu0 0.0
    %489 = vmatpush2.msra.mxu0 0.0
    %490 = vmatprep.subr.mxu0 0.0
    %491 = vmatpush2.msra.mxu0 0.0
    %492 = vmatprep.subr.mxu0 0.0
    %493 = vmatpush2.msra.mxu0 0.0
    %494 = vmatprep.subr.mxu0 0.0
    %495 = vmatpush2.msra.mxu0 0.0
    %496 = vmatprep.subr.mxu0 0.0
    %497 = vmatpush2.msra.mxu0 0.0
    %498 = vmatprep.subr.mxu0 0.0
    %499 = vmatpush2.msra.mxu0 0.0
    %500 = vmatprep.subr.mxu0 0.0
    %501 = vmatpush2.msra.mxu0 0.0
    %502 = vmatprep.mubr.f32.mxu0 0.0
    %503 = vmatmul.mubr.f32.gmra.mxu0 %v73
    %v504 = vpop.f32.mrf.mxu0
    %v505 = vadd.f32 0.0, %v504
    %v506 = vpop.f32.mrf.mxu0
    %507 = vmatprep.mubr.f32.mxu0 0.0
    %508 = vmatmul.mubr.f32.gmra.mxu0 %v76
    %v509 = vpop.f32.mrf.mxu0
    %v510 = vadd.f32 0.0, %v509
    %v511 = vpop.f32.mrf.mxu0
    %512 = vdwg.mxu0
    %s513 = scalar_lea.vmem [#allocation2], 256
    %v514 = vld [vmem:[%s513] sm:$0xff]
    %v515 = vld [vmem:[%s513 + $0x8] sm:$0xff]
    %v516 = vld [vmem:[%s513 + $0x10] sm:$0xff]
    %v517 = vld [vmem:[%s513 + $0x18] sm:$0xff]
    %v518 = vld [vmem:[%s513 + $0x20] sm:$0xff]
    %v519 = vld [vmem:[%s513 + $0x28] sm:$0xff]
    %v520 = vld [vmem:[%s513 + $0x30] sm:$0xff]
    %v521 = vld [vmem:[%s513 + $0x38] sm:$0xff]
    %v522 = vld [vmem:[%s513 + $0x40] sm:$0xff]
    %v523 = vld [vmem:[%s513 + $0x48] sm:$0xff]
    %v524 = vld [vmem:[%s513 + $0x50] sm:$0xff]
    %v525 = vld [vmem:[%s513 + $0x58] sm:$0xff]
    %v526 = vld [vmem:[%s513 + $0x60] sm:$0xff]
    %v527 = vld [vmem:[%s513 + $0x68] sm:$0xff]
    %v528 = vld [vmem:[%s513 + $0x70] sm:$0xff]
    %v529 = vld [vmem:[%s513 + $0x78] sm:$0xff]
    %s530 = scalar_lea.vmem %s3, 2
    %v531 = vld [vmem:[%s530] sm:$0x1]
    %v533 = vlaneseq
    %v534 = vshrl.u32 %v533, 7
    %v535 = vsub.s32 0, %v534
    %v536 = vrot.slane %v531, %v535
    %538 = vmatprep.subr.mxu0 0.0
    %539 = vmatpush1.msra.mxu0 %v529
    %540 = vmatprep.subr.mxu0 0.0
    %541 = vmatpush1.msra.mxu0 %v528
    %542 = vmatprep.subr.mxu0 0.0
    %543 = vmatpush1.msra.mxu0 %v527
    %544 = vmatprep.subr.mxu0 0.0
    %545 = vmatpush1.msra.mxu0 %v526
    %546 = vmatprep.subr.mxu0 0.0
    %547 = vmatpush1.msra.mxu0 %v525
    %548 = vmatprep.subr.mxu0 0.0
    %549 = vmatpush1.msra.mxu0 %v524
    %550 = vmatprep.subr.mxu0 0.0
    %551 = vmatpush1.msra.mxu0 %v523
    %552 = vmatprep.subr.mxu0 0.0
    %553 = vmatpush1.msra.mxu0 %v522
    %554 = vmatprep.subr.mxu0 0.0
    %555 = vmatpush1.msra.mxu0 %v521
    %556 = vmatprep.subr.mxu0 0.0
    %557 = vmatpush1.msra.mxu0 %v520
    %558 = vmatprep.subr.mxu0 0.0
    %559 = vmatpush1.msra.mxu0 %v519
    %560 = vmatprep.subr.mxu0 0.0
    %561 = vmatpush1.msra.mxu0 %v518
    %562 = vmatprep.subr.mxu0 0.0
    %563 = vmatpush1.msra.mxu0 %v517
    %564 = vmatprep.subr.mxu0 0.0
    %565 = vmatpush1.msra.mxu0 %v516
    %566 = vmatprep.subr.mxu0 0.0
    %567 = vmatpush1.msra.mxu0 %v515
    %568 = vmatprep.subr.mxu0 0.0
    %569 = vmatpush1.msra.mxu0 %v514
    %570 = vmatprep.subr.mxu0 0.0
    %571 = vmatpush2.msra.mxu0 0.0
    %572 = vmatprep.subr.mxu0 0.0
    %573 = vmatpush2.msra.mxu0 0.0
    %574 = vmatprep.subr.mxu0 0.0
    %575 = vmatpush2.msra.mxu0 0.0
    %576 = vmatprep.subr.mxu0 0.0
    %577 = vmatpush2.msra.mxu0 0.0
    %578 = vmatprep.subr.mxu0 0.0
    %579 = vmatpush2.msra.mxu0 0.0
    %580 = vmatprep.subr.mxu0 0.0
    %581 = vmatpush2.msra.mxu0 0.0
    %582 = vmatprep.subr.mxu0 0.0
    %583 = vmatpush2.msra.mxu0 0.0
    %584 = vmatprep.subr.mxu0 0.0
    %585 = vmatpush2.msra.mxu0 0.0
    %586 = vmatprep.subr.mxu0 0.0
    %587 = vmatpush2.msra.mxu0 0.0
    %588 = vmatprep.subr.mxu0 0.0
    %589 = vmatpush2.msra.mxu0 0.0
    %590 = vmatprep.subr.mxu0 0.0
    %591 = vmatpush2.msra.mxu0 0.0
    %592 = vmatprep.subr.mxu0 0.0
    %593 = vmatpush2.msra.mxu0 0.0
    %594 = vmatprep.subr.mxu0 0.0
    %595 = vmatpush2.msra.mxu0 0.0
    %596 = vmatprep.subr.mxu0 0.0
    %597 = vmatpush2.msra.mxu0 0.0
    %598 = vmatprep.subr.mxu0 0.0
    %599 = vmatpush2.msra.mxu0 0.0
    %600 = vmatprep.subr.mxu0 0.0
    %601 = vmatpush2.msra.mxu0 0.0
    %602 = vmatprep.mubr.f32.mxu0 0.0
    %603 = vmatmul.mubr.f32.gmra.mxu0 %v505
    %v604 = vpop.f32.mrf.mxu0
    %v605 = vadd.f32 %v536, %v604
    %v606 = vpop.f32.mrf.mxu0
    %607 = vmatprep.mubr.f32.mxu0 0.0
    %608 = vmatmul.mubr.f32.gmra.mxu0 %v510
    %v609 = vpop.f32.mrf.mxu0
    %v610 = vadd.f32 %v536, %v609
    %v611 = vpop.f32.mrf.mxu0
    %612 = vdwg.mxu0
    %vm613 = vcmp.gt.f32.partialorder %v605, 0.0
    %vm614 = vcmp.gt.f32.partialorder %v610, 0.0
    %v615 = vmul.f32 %v605, 0.01
    %v616 = vmul.f32 %v610, 0.01
    %v617 = vsel %vm613, %v605, %v615
    %v618 = vsel %vm614, %v610, %v616
    %v619 = vld [vmem:[#allocation4] sm:$0xff]
    %v620 = vld [vmem:[#allocation4 + $0x8] sm:$0xff]
    %v621 = vld [vmem:[#allocation4 + $0x10] sm:$0xff]
    %v622 = vld [vmem:[#allocation4 + $0x18] sm:$0xff]
    %v623 = vld [vmem:[#allocation4 + $0x20] sm:$0xff]
    %v624 = vld [vmem:[#allocation4 + $0x28] sm:$0xff]
    %v625 = vld [vmem:[#allocation4 + $0x30] sm:$0xff]
    %v626 = vld [vmem:[#allocation4 + $0x38] sm:$0xff]
    %v627 = vld [vmem:[#allocation4 + $0x40] sm:$0xff]
    %v628 = vld [vmem:[#allocation4 + $0x48] sm:$0xff]
    %v629 = vld [vmem:[#allocation4 + $0x50] sm:$0xff]
    %v630 = vld [vmem:[#allocation4 + $0x58] sm:$0xff]
    %v631 = vld [vmem:[#allocation4 + $0x60] sm:$0xff]
    %v632 = vld [vmem:[#allocation4 + $0x68] sm:$0xff]
    %v633 = vld [vmem:[#allocation4 + $0x70] sm:$0xff]
    %v634 = vld [vmem:[#allocation4 + $0x78] sm:$0xff]
    %v635 = vld [vmem:[#allocation6] sm:$0xff]
    %v636 = vld [vmem:[#allocation6 + $0x8] sm:$0xff]
    %v637 = vld [vmem:[#allocation6 + $0x10] sm:$0xff]
    %v638 = vld [vmem:[#allocation6 + $0x18] sm:$0xff]
    %v639 = vld [vmem:[#allocation6 + $0x20] sm:$0xff]
    %v640 = vld [vmem:[#allocation6 + $0x28] sm:$0xff]
    %v641 = vld [vmem:[#allocation6 + $0x30] sm:$0xff]
    %v642 = vld [vmem:[#allocation6 + $0x38] sm:$0xff]
    %v643 = vld [vmem:[#allocation6 + $0x40] sm:$0xff]
    %v644 = vld [vmem:[#allocation6 + $0x48] sm:$0xff]
    %v645 = vld [vmem:[#allocation6 + $0x50] sm:$0xff]
    %v646 = vld [vmem:[#allocation6 + $0x58] sm:$0xff]
    %v647 = vld [vmem:[#allocation6 + $0x60] sm:$0xff]
    %v648 = vld [vmem:[#allocation6 + $0x68] sm:$0xff]
    %v649 = vld [vmem:[#allocation6 + $0x70] sm:$0xff]
    %v650 = vld [vmem:[#allocation6 + $0x78] sm:$0xff]
    %651 = vmatprep.subr.mxu0 0.0
    %652 = vmatpush1.msra.mxu0 %v650
    %653 = vmatprep.subr.mxu0 0.0
    %654 = vmatpush1.msra.mxu0 %v649
    %655 = vmatprep.subr.mxu0 0.0
    %656 = vmatpush1.msra.mxu0 %v648
    %657 = vmatprep.subr.mxu0 0.0
    %658 = vmatpush1.msra.mxu0 %v647
    %659 = vmatprep.subr.mxu0 0.0
    %660 = vmatpush1.msra.mxu0 %v646
    %661 = vmatprep.subr.mxu0 0.0
    %662 = vmatpush1.msra.mxu0 %v645
    %663 = vmatprep.subr.mxu0 0.0
    %664 = vmatpush1.msra.mxu0 %v644
    %665 = vmatprep.subr.mxu0 0.0
    %666 = vmatpush1.msra.mxu0 %v643
    %667 = vmatprep.subr.mxu0 0.0
    %668 = vmatpush1.msra.mxu0 %v642
    %669 = vmatprep.subr.mxu0 0.0
    %670 = vmatpush1.msra.mxu0 %v641
    %671 = vmatprep.subr.mxu0 0.0
    %672 = vmatpush1.msra.mxu0 %v640
    %673 = vmatprep.subr.mxu0 0.0
    %674 = vmatpush1.msra.mxu0 %v639
    %675 = vmatprep.subr.mxu0 0.0
    %676 = vmatpush1.msra.mxu0 %v638
    %677 = vmatprep.subr.mxu0 0.0
    %678 = vmatpush1.msra.mxu0 %v637
    %679 = vmatprep.subr.mxu0 0.0
    %680 = vmatpush1.msra.mxu0 %v636
    %681 = vmatprep.subr.mxu0 0.0
    %682 = vmatpush1.msra.mxu0 %v635
    %683 = vmatprep.subr.mxu0 0.0
    %684 = vmatpush2.msra.mxu0 0.0
    %685 = vmatprep.subr.mxu0 0.0
    %686 = vmatpush2.msra.mxu0 0.0
    %687 = vmatprep.subr.mxu0 0.0
    %688 = vmatpush2.msra.mxu0 0.0
    %689 = vmatprep.subr.mxu0 0.0
    %690 = vmatpush2.msra.mxu0 0.0
    %691 = vmatprep.subr.mxu0 0.0
    %692 = vmatpush2.msra.mxu0 0.0
    %693 = vmatprep.subr.mxu0 0.0
    %694 = vmatpush2.msra.mxu0 0.0
    %695 = vmatprep.subr.mxu0 0.0
    %696 = vmatpush2.msra.mxu0 0.0
    %697 = vmatprep.subr.mxu0 0.0
    %698 = vmatpush2.msra.mxu0 0.0
    %699 = vmatprep.subr.mxu0 0.0
    %700 = vmatpush2.msra.mxu0 0.0
    %701 = vmatprep.subr.mxu0 0.0
    %702 = vmatpush2.msra.mxu0 0.0
    %703 = vmatprep.subr.mxu0 0.0
    %704 = vmatpush2.msra.mxu0 0.0
    %705 = vmatprep.subr.mxu0 0.0
    %706 = vmatpush2.msra.mxu0 0.0
    %707 = vmatprep.subr.mxu0 0.0
    %708 = vmatpush2.msra.mxu0 0.0
    %709 = vmatprep.subr.mxu0 0.0
    %710 = vmatpush2.msra.mxu0 0.0
    %711 = vmatprep.subr.mxu0 0.0
    %712 = vmatpush2.msra.mxu0 0.0
    %713 = vmatprep.subr.mxu0 0.0
    %714 = vmatpush2.msra.mxu0 0.0
    %715 = vmatprep.mubr.f32.mxu0 0.0
    %716 = vmatmul.mubr.f32.gmra.mxu0 %v617
    %v717 = vpop.f32.mrf.mxu0
    %v718 = vadd.f32 0.0, %v717
    %v719 = vpop.f32.mrf.mxu0
    %720 = vmatprep.mubr.f32.mxu0 0.0
    %721 = vmatmul.mubr.f32.gmra.mxu0 %v618
    %v722 = vpop.f32.mrf.mxu0
    %v723 = vadd.f32 0.0, %v722
    %v724 = vpop.f32.mrf.mxu0
    %725 = vdwg.mxu0
    %726 = vmatprep.subr.mxu0 0.0
    %727 = vmatpush1.msra.mxu0 %v634
    %728 = vmatprep.subr.mxu0 0.0
    %729 = vmatpush1.msra.mxu0 %v633
    %730 = vmatprep.subr.mxu0 0.0
    %731 = vmatpush1.msra.mxu0 %v632
    %732 = vmatprep.subr.mxu0 0.0
    %733 = vmatpush1.msra.mxu0 %v631
    %734 = vmatprep.subr.mxu0 0.0
    %735 = vmatpush1.msra.mxu0 %v630
    %736 = vmatprep.subr.mxu0 0.0
    %737 = vmatpush1.msra.mxu0 %v629
    %738 = vmatprep.subr.mxu0 0.0
    %739 = vmatpush1.msra.mxu0 %v628
    %740 = vmatprep.subr.mxu0 0.0
    %741 = vmatpush1.msra.mxu0 %v627
    %742 = vmatprep.subr.mxu0 0.0
    %743 = vmatpush1.msra.mxu0 %v626
    %744 = vmatprep.subr.mxu0 0.0
    %745 = vmatpush1.msra.mxu0 %v625
    %746 = vmatprep.subr.mxu0 0.0
    %747 = vmatpush1.msra.mxu0 %v624
    %748 = vmatprep.subr.mxu0 0.0
    %749 = vmatpush1.msra.mxu0 %v623
    %750 = vmatprep.subr.mxu0 0.0
    %751 = vmatpush1.msra.mxu0 %v622
    %752 = vmatprep.subr.mxu0 0.0
    %753 = vmatpush1.msra.mxu0 %v621
    %754 = vmatprep.subr.mxu0 0.0
    %755 = vmatpush1.msra.mxu0 %v620
    %756 = vmatprep.subr.mxu0 0.0
    %757 = vmatpush1.msra.mxu0 %v619
    %758 = vmatprep.subr.mxu0 0.0
    %759 = vmatpush2.msra.mxu0 0.0
    %760 = vmatprep.subr.mxu0 0.0
    %761 = vmatpush2.msra.mxu0 0.0
    %762 = vmatprep.subr.mxu0 0.0
    %763 = vmatpush2.msra.mxu0 0.0
    %764 = vmatprep.subr.mxu0 0.0
    %765 = vmatpush2.msra.mxu0 0.0
    %766 = vmatprep.subr.mxu0 0.0
    %767 = vmatpush2.msra.mxu0 0.0
    %768 = vmatprep.subr.mxu0 0.0
    %769 = vmatpush2.msra.mxu0 0.0
    %770 = vmatprep.subr.mxu0 0.0
    %771 = vmatpush2.msra.mxu0 0.0
    %772 = vmatprep.subr.mxu0 0.0
    %773 = vmatpush2.msra.mxu0 0.0
    %774 = vmatprep.subr.mxu0 0.0
    %775 = vmatpush2.msra.mxu0 0.0
    %776 = vmatprep.subr.mxu0 0.0
    %777 = vmatpush2.msra.mxu0 0.0
    %778 = vmatprep.subr.mxu0 0.0
    %779 = vmatpush2.msra.mxu0 0.0
    %780 = vmatprep.subr.mxu0 0.0
    %781 = vmatpush2.msra.mxu0 0.0
    %782 = vmatprep.subr.mxu0 0.0
    %783 = vmatpush2.msra.mxu0 0.0
    %784 = vmatprep.subr.mxu0 0.0
    %785 = vmatpush2.msra.mxu0 0.0
    %786 = vmatprep.subr.mxu0 0.0
    %787 = vmatpush2.msra.mxu0 0.0
    %788 = vmatprep.subr.mxu0 0.0
    %789 = vmatpush2.msra.mxu0 0.0
    %790 = vmatprep.mubr.f32.mxu0 0.0
    %791 = vmatmul.mubr.f32.gmra.mxu0 %v67
    %v792 = vpop.f32.mrf.mxu0
    %v793 = vadd.f32 %v718, %v792
    %v794 = vpop.f32.mrf.mxu0
    %795 = vmatprep.mubr.f32.mxu0 0.0
    %796 = vmatmul.mubr.f32.gmra.mxu0 %v68
    %v797 = vpop.f32.mrf.mxu0
    %v798 = vadd.f32 %v723, %v797
    %v799 = vpop.f32.mrf.mxu0
    %800 = vdwg.mxu0
    %v801 = vld [vmem:[%s6] sm:$0x1]
    %v803 = vlaneseq
    %v804 = vshrl.u32 %v803, 7
    %v805 = vsub.s32 0, %v804
    %v806 = vrot.slane %v801, %v805
    %v808 = vadd.f32 %v793, %v806
    %v809 = vadd.f32 %v798, %v806
    %810 = vst [vmem:[%s7] sm:$0xff] %v808
    %811 = vst [vmem:[%s7 + $0x8] sm:$0xff] %v809
    // Predicated region
    $region42: #{zagcnn_forward.2} parent=1 // pred_check
      _
    $region43: #{zagcnn_forward.2} parent=1 // pred_check_branch
      %813 = sbr.rel (0) target = $region45
    $region44: #{zagcnn_forward.2} parent=1 // pred_region
      _
    $region45: #{zagcnn_forward.2} parent=1 // pred_fallthru
      _
    // Predicated region
    $region46: #{zagcnn_forward.2} parent=1 // pred_check
      _
    $region47: #{zagcnn_forward.2} parent=1 // pred_check_branch
      %815 = sbr.rel (0) target = $region49
    $region48: #{zagcnn_forward.2} parent=1 // pred_region
      _
    $region49: #{zagcnn_forward.2} parent=1 // pred_fallthru
      _
    %816 = vsyncpa [#allocation3], 1
    %817 = vsyncpa [#allocation5], 1

</llo_original>
